<compile_context>
chip_gen: v7x
topology: tpu7x:2x2x1
jax: 0.10.0
libtpu: 0.0.40
codegen_flags: <defaults>
</compile_context>

<pallas_src>
import functools

import jax
import jax.numpy as jnp
import numpy as np
from jax.experimental import pallas as pl
from jax.experimental.pallas import tpu as pltpu


# --------------------------------------------------------------------------------------
# Kernels
# --------------------------------------------------------------------------------------
def _deconv_bn_relu_kernel(p_ref, w_ref, g_ref, b_ref, out_ref, *, cout, eps, inv_count):
    """Phase-decomposed transposed conv + train-mode BN + ReLU.

    p_ref:   (4*Cin, NHW)   4 shifted copies of x stacked on sublanes, spatial lane-dense
    w_ref:   (4*Cout, 4*Cin) phase-combined ConvTranspose2d weight
    g_ref:   (Cout, 1)       BN gamma
    b_ref:   (Cout, 1)       BN beta
    out_ref: (4*Cout, NHW)   phase-major rows (row = phase*Cout + co), post BN+ReLU
    """
    acc = jnp.dot(w_ref[...], p_ref[...], preferred_element_type=jnp.float32)  # (4C, NHW)

    # Per-output-channel batch statistics: channel co lives in rows {p*Cout+co, p=0..3}.
    blocks = [acc[p * cout:(p + 1) * cout, :] for p in range(4)]
    row_sums = [jnp.sum(blk, axis=1, keepdims=True) for blk in blocks]          # (Cout,1)
    mean = (row_sums[0] + row_sums[1] + row_sums[2] + row_sums[3]) * inv_count  # (Cout,1)

    centered = [blk - mean for blk in blocks]
    sq_sums = [jnp.sum(c * c, axis=1, keepdims=True) for c in centered]
    var = (sq_sums[0] + sq_sums[1] + sq_sums[2] + sq_sums[3]) * inv_count       # biased

    scale = jax.lax.rsqrt(var + eps) * g_ref[...]                               # (Cout,1)
    shift = b_ref[...]
    for p in range(4):
        out_ref[p * cout:(p + 1) * cout, :] = jnp.maximum(
            centered[p] * scale + shift, 0.0)


def _conv_bn_relu_kernel(p_ref, w_ref, g_ref, b_ref, out_ref, *, eps, inv_count):
    """3x3 conv (single im2col matmul) + train-mode BN + ReLU.

    p_ref:   (9*Cz, NHW2) im2col patch matrix, spatial lane-dense
    w_ref:   (Cout, 9*Cz) reshaped Conv2d weight
    g_ref:   (Cout, 1), b_ref: (Cout, 1)
    out_ref: (Cout, NHW2)
    """
    acc = jnp.dot(w_ref[...], p_ref[...], preferred_element_type=jnp.float32)   # (Cout, NHW2)
    mean = jnp.sum(acc, axis=1, keepdims=True) * inv_count
    cen = acc - mean
    var = jnp.sum(cen * cen, axis=1, keepdims=True) * inv_count                 # biased
    scale = jax.lax.rsqrt(var + eps) * g_ref[...]
    out_ref[...] = jnp.maximum(cen * scale + b_ref[...], 0.0)


# --------------------------------------------------------------------------------------
# Wrapper
# --------------------------------------------------------------------------------------
def deconv2d_fuse_forward(x_pre, x, w_deconv, bn1_gamma, bn1_beta,
                          w_conv, bn2_gamma, bn2_beta, eps=1e-5):
    """x_pre: (N, Cout, 2H, 2W);  x: (N, Cin, H, W)
       w_deconv: (Cin, Cout, 3, 3) ConvTranspose2d weight
       w_conv:   (Cout, 2*Cout, 3, 3) Conv2d weight
       returns (N, Cout, 2H, 2W)."""
    f32 = jnp.float32
    N, Cin, H, W = x.shape
    Cout = w_deconv.shape[1]
    C2 = 2 * Cout
    Ho, Wo = 2 * H, 2 * W
    nhw = N * H * W
    nhw2 = N * Ho * Wo
    assert w_deconv.shape == (Cin, Cout, 3, 3)
    assert x_pre.shape == (N, Cout, Ho, Wo)
    assert w_conv.shape == (Cout, C2, 3, 3)

    # ---------------- stage 1: transposed conv via sub-pixel phases ----------------
    # channel-first, pad 1 at bottom/right (needed by the odd phases)
    x_cf = jnp.transpose(x, (1, 0, 2, 3)).astype(f32)                 # (Cin, N, H, W)
    x_cfp = jnp.pad(x_cf, ((0, 0), (0, 0), (0, 1), (0, 1)))
    shifts = [x_cfp[:, :, dh:dh + H, dw:dw + W].reshape(Cin, nhw)
              for dh in (0, 1) for dw in (0, 1)]                      # s = dh*2 + dw
    p1 = jnp.concatenate(shifts, axis=0)                              # (4*Cin, NHW)

    # phase-combined weight: row = phase*Cout + co, col = shift*Cin + ci
    # phase p = ph*2 + pw (ph/pw = output row/col parity); stride=2, padding=1, out_pad=1
    wt = jnp.transpose(w_deconv, (1, 0, 2, 3)).astype(f32)            # (Cout, Cin, kh, kw)
    wall = jnp.zeros((4 * Cout, 4 * Cin), f32)
    assign = [  # (phase, shift, kh, kw)
        (0, 0, 1, 1),
        (1, 1, 1, 0), (1, 0, 1, 2),
        (2, 2, 0, 1), (2, 0, 2, 1),
        (3, 3, 0, 0), (3, 2, 0, 2), (3, 1, 2, 0), (3, 0, 2, 2),
    ]
    for p, s, kh, kw in assign:
        wall = wall.at[p * Cout:(p + 1) * Cout, s * Cin:(s + 1) * Cin].set(wt[:, :, kh, kw])

    g1 = bn1_gamma.astype(f32).reshape(Cout, 1)
    b1 = bn1_beta.astype(f32).reshape(Cout, 1)

    k1 = functools.partial(_deconv_bn_relu_kernel, cout=Cout, eps=float(eps),
                           inv_count=1.0 / float(nhw2))
    y1 = pl.pallas_call(
        k1,
        out_shape=jax.ShapeDtypeStruct((4 * Cout, nhw), f32),
        grid=(1,),
        in_specs=[
            pl.BlockSpec((4 * Cin, nhw), lambda i: (0, 0)),
            pl.BlockSpec((4 * Cout, 4 * Cin), lambda i: (0, 0)),
            pl.BlockSpec((Cout, 1), lambda i: (0, 0)),
            pl.BlockSpec((Cout, 1), lambda i: (0, 0)),
        ],
        out_specs=pl.BlockSpec((4 * Cout, nhw), lambda i: (0, 0)),
        compiler_params=pltpu.CompilerParams(dimension_semantics=("arbitrary",)),
        cost_estimate=pl.CostEstimate(
            flops=2 * (4 * Cout) * (4 * Cin) * nhw,
            transcendentals=0,
            bytes_accessed=4 * (4 * Cin * nhw + 16 * Cout * Cin + 4 * Cout * nhw)),
    )(p1, wall, g1, b1)

    # phase de-interleave (depth-to-space): (4*Cout, NHW) -> (Cout, N, 2H, 2W)
    y1 = (y1.reshape(2, 2, Cout, N, H, W)
            .transpose(2, 3, 4, 0, 5, 1)
            .reshape(Cout, N, Ho, Wo))

    # ---------------- stage 2: concat + 3x3 conv (pad 1) + BN + ReLU ----------------
    z = jnp.concatenate([y1, jnp.transpose(x_pre, (1, 0, 2, 3)).astype(f32)], axis=0)
    zp = jnp.pad(z, ((0, 0), (0, 0), (1, 1), (1, 1)))                 # (2C, N, Ho+2, Wo+2)
    patches = [zp[:, :, kh:kh + Ho, kw:kw + Wo].reshape(C2, nhw2)
               for kh in range(3) for kw in range(3)]
    p2 = jnp.concatenate(patches, axis=0)                             # (9*2C, NHW2)

    # (Cout, 9*2C): col = (kh*3 + kw)*2C + ci
    w2m = jnp.transpose(w_conv.astype(f32), (2, 3, 1, 0)).reshape(9 * C2, Cout).T

    g2 = bn2_gamma.astype(f32).reshape(Cout, 1)
    b2 = bn2_beta.astype(f32).reshape(Cout, 1)

    k2 = functools.partial(_conv_bn_relu_kernel, eps=float(eps),
                           inv_count=1.0 / float(nhw2))
    y2 = pl.pallas_call(
        k2,
        out_shape=jax.ShapeDtypeStruct((Cout, nhw2), f32),
        grid=(1,),
        in_specs=[
            pl.BlockSpec((9 * C2, nhw2), lambda i: (0, 0)),
            pl.BlockSpec((Cout, 9 * C2), lambda i: (0, 0)),
            pl.BlockSpec((Cout, 1), lambda i: (0, 0)),
            pl.BlockSpec((Cout, 1), lambda i: (0, 0)),
        ],
        out_specs=pl.BlockSpec((Cout, nhw2), lambda i: (0, 0)),
        compiler_params=pltpu.CompilerParams(dimension_semantics=("arbitrary",)),
        cost_estimate=pl.CostEstimate(
            flops=2 * Cout * (9 * C2) * nhw2,
            transcendentals=0,
            bytes_accessed=4 * (9 * C2 * nhw2 + 9 * C2 * Cout + Cout * nhw2)),
    )(p2, w2m, g2, b2)

    # back to PyTorch NCHW
    return y2.reshape(Cout, N, Ho, Wo).transpose(1, 0, 2, 3)


# --------------------------------------------------------------------------------------
# Independent numpy reference (float64)
# --------------------------------------------------------------------------------------
def _ref_forward(x_pre, x, w1, g1, b1, w2, g2, b2, eps=1e-5):
    xn = np.asarray(x, np.float64)
    xpre = np.asarray(x_pre, np.float64)
    w1n = np.asarray(w1, np.float64)
    w2n = np.asarray(w2, np.float64)
    g1n, b1n = np.asarray(g1, np.float64), np.asarray(b1, np.float64)
    g2n, b2n = np.asarray(g2, np.float64), np.asarray(b2, np.float64)
    N, Cin, H, W = xn.shape
    Cout = w1n.shape[1]
    Ho, Wo = 2 * H, 2 * W

    # ConvTranspose2d stride=2, padding=1, output_padding=1 (scatter form, no bias)
    full = np.zeros((N, Cout, 2 * H + 1, 2 * W + 1), np.float64)
    for kh in range(3):
        for kw in range(3):
            contrib = np.einsum('nihw,io->nohw', xn, w1n[:, :, kh, kw])
            full[:, :, kh:kh + 2 * H:2, kw:kw + 2 * W:2] += contrib
    y = full[:, :, 1:1 + Ho, 1:1 + Wo]            # padding=1 crop + output_padding=1
    y = y[:, :, :Ho, :Wo]                          # explicit crop in Deconv2d.forward
    mu = y.mean(axis=(0, 2, 3), keepdims=True)
    var = y.var(axis=(0, 2, 3), keepdims=True)     # biased (train-mode BN)
    y = (y - mu) / np.sqrt(var + eps) * g1n.reshape(1, -1, 1, 1) + b1n.reshape(1, -1, 1, 1)
    y = np.maximum(y, 0.0)

    z = np.concatenate([y, xpre], axis=1)
    zp = np.pad(z, ((0, 0), (0, 0), (1, 1), (1, 1)))
    out = np.zeros((N, Cout, Ho, Wo), np.float64)
    for kh in range(3):
        for kw in range(3):
            out += np.einsum('nchw,oc->nohw',
                             zp[:, :, kh:kh + Ho, kw:kw + Wo], w2n[:, :, kh, kw])
    mu = out.mean(axis=(0, 2, 3), keepdims=True)
    var = out.var(axis=(0, 2, 3), keepdims=True)
    out = (out - mu) / np.sqrt(var + eps) * g2n.reshape(1, -1, 1, 1) + b2n.reshape(1, -1, 1, 1)
    return np.maximum(out, 0.0)


# --------------------------------------------------------------------------------------
if __name__ == "__main__":
    N, Cin, Cout, H, W = 2, 4, 4, 16, 16
    key = jax.random.PRNGKey(0)
    kx, kp, kw1, kw2, kg, kb = jax.random.split(key, 6)

    x = jax.random.normal(kx, (N, Cin, H, W), jnp.float32)
    x_pre = jax.random.normal(kp, (N, Cout, 2 * H, 2 * W), jnp.float32)

    # xavier_uniform-style deterministic init
    lim1 = float(np.sqrt(6.0 / (Cout * 9 + Cin * 9)))
    w1 = jax.random.uniform(kw1, (Cin, Cout, 3, 3), jnp.float32, -lim1, lim1)
    lim2 = float(np.sqrt(6.0 / (2 * Cout * 9 + Cout * 9)))
    w2 = jax.random.uniform(kw2, (Cout, 2 * Cout, 3, 3), jnp.float32, -lim2, lim2)

    # BN params: first BN randomized (exercises affine wiring), second at init (1, 0)
    gamma1 = 1.0 + 0.1 * jax.random.normal(kg, (Cout,), jnp.float32)
    beta1 = 0.1 * jax.random.normal(kb, (Cout,), jnp.float32)
    gamma2 = jnp.ones((Cout,), jnp.float32)
    beta2 = jnp.zeros((Cout,), jnp.float32)

    fwd = jax.jit(deconv2d_fuse_forward)
    out = jax.block_until_ready(fwd(x_pre, x, w1, gamma1, beta1, w2, gamma2, beta2))

    ref = _ref_forward(x_pre, x, w1, gamma1, beta1, w2, gamma2, beta2)
    assert out.shape == ref.shape, (out.shape, ref.shape)
    np.testing.assert_allclose(np.asarray(out), ref, rtol=1e-3, atol=1e-3)
    print("KERNEL_OK")
</pallas_src>

<mosaic_0001>
module attributes {stable_mosaic.version = 11 : i64} {
  func.func @_deconv_bn_relu_kernel(%arg0: i32, %arg1: memref<16x512xf32, #tpu.memory_space<vmem>>, %arg2: memref<16x16xf32, #tpu.memory_space<vmem>>, %arg3: memref<4x1xf32, #tpu.memory_space<vmem>>, %arg4: memref<4x1xf32, #tpu.memory_space<vmem>>, %arg5: memref<16x512xf32, #tpu.memory_space<vmem>>) attributes {dimension_semantics = [#tpu.dimension_semantics<arbitrary>], iteration_bounds = array<i64: 1>, scalar_prefetch = 0 : i64, scratch_operands = 0 : i64, tpu.core_type = #tpu.core_type<tc>, window_params = [{pipeline_mode = #tpu.pipeline_mode<synchronous>, transform_indices = @transform_0, window_bounds = array<i64: 16, 512>}, {pipeline_mode = #tpu.pipeline_mode<synchronous>, transform_indices = @transform_1, window_bounds = array<i64: 16, 16>}, {pipeline_mode = #tpu.pipeline_mode<synchronous>, transform_indices = @transform_2, window_bounds = array<i64: 4, 1>}, {pipeline_mode = #tpu.pipeline_mode<synchronous>, transform_indices = @transform_3, window_bounds = array<i64: 4, 1>}, {pipeline_mode = #tpu.pipeline_mode<synchronous>, transform_indices = @transform_4, window_bounds = array<i64: 16, 512>}]} {
    %c0 = arith.constant 0 : index
    %c0_0 = arith.constant 0 : index
    %0 = vector.load %arg2[%c0, %c0_0] : memref<16x16xf32, #tpu.memory_space<vmem>>, vector<16x16xf32>
    %c0_1 = arith.constant 0 : index
    %c0_2 = arith.constant 0 : index
    %1 = vector.load %arg1[%c0_1, %c0_2] : memref<16x512xf32, #tpu.memory_space<vmem>>, vector<16x512xf32>
    %cst = arith.constant dense<0.000000e+00> : vector<16x512xf32>
    %2 = tpu.matmul %0, %1, %cst {dimension_numbers = #tpu.dot_dimension_numbers<[1], [0], [0], [1], [0, 0, 1, 1], [], []>} : vector<16x16xf32>, vector<16x512xf32>, vector<16x512xf32> -> vector<16x512xf32>
    %3 = vector.extract_strided_slice %2 {offsets = [0, 0], sizes = [4, 512], strides = [1, 1]} : vector<16x512xf32> to vector<4x512xf32>
    %4 = vector.extract_strided_slice %2 {offsets = [4, 0], sizes = [4, 512], strides = [1, 1]} : vector<16x512xf32> to vector<4x512xf32>
    %5 = vector.extract_strided_slice %2 {offsets = [8, 0], sizes = [4, 512], strides = [1, 1]} : vector<16x512xf32> to vector<4x512xf32>
    %6 = vector.extract_strided_slice %2 {offsets = [12, 0], sizes = [4, 512], strides = [1, 1]} : vector<16x512xf32> to vector<4x512xf32>
    %cst_3 = arith.constant dense<0.000000e+00> : vector<4xf32>
    %7 = vector.multi_reduction <add>, %3, %cst_3 [1] : vector<4x512xf32> to vector<4xf32>
    %8 = vector.shape_cast %7 : vector<4xf32> to vector<4x1xf32>
    %cst_4 = arith.constant dense<0.000000e+00> : vector<4xf32>
    %9 = vector.multi_reduction <add>, %4, %cst_4 [1] : vector<4x512xf32> to vector<4xf32>
    %10 = vector.shape_cast %9 : vector<4xf32> to vector<4x1xf32>
    %cst_5 = arith.constant dense<0.000000e+00> : vector<4xf32>
    %11 = vector.multi_reduction <add>, %5, %cst_5 [1] : vector<4x512xf32> to vector<4xf32>
    %12 = vector.shape_cast %11 : vector<4xf32> to vector<4x1xf32>
    %cst_6 = arith.constant dense<0.000000e+00> : vector<4xf32>
    %13 = vector.multi_reduction <add>, %6, %cst_6 [1] : vector<4x512xf32> to vector<4xf32>
    %14 = vector.shape_cast %13 : vector<4xf32> to vector<4x1xf32>
    %15 = arith.addf %8, %10 : vector<4x1xf32>
    %16 = arith.addf %15, %12 : vector<4x1xf32>
    %17 = arith.addf %16, %14 : vector<4x1xf32>
    %cst_7 = arith.constant 4.8828125E-4 : f32
    %18 = vector.broadcast %cst_7 : f32 to vector<4x1xf32>
    %19 = arith.mulf %17, %18 : vector<4x1xf32>
    %20 = vector.broadcast %19 : vector<4x1xf32> to vector<4x512xf32>
    %21 = arith.subf %3, %20 : vector<4x512xf32>
    %22 = vector.broadcast %19 : vector<4x1xf32> to vector<4x512xf32>
    %23 = arith.subf %4, %22 : vector<4x512xf32>
    %24 = vector.broadcast %19 : vector<4x1xf32> to vector<4x512xf32>
    %25 = arith.subf %5, %24 : vector<4x512xf32>
    %26 = vector.broadcast %19 : vector<4x1xf32> to vector<4x512xf32>
    %27 = arith.subf %6, %26 : vector<4x512xf32>
    %28 = arith.mulf %21, %21 : vector<4x512xf32>
    %cst_8 = arith.constant dense<0.000000e+00> : vector<4xf32>
    %29 = vector.multi_reduction <add>, %28, %cst_8 [1] : vector<4x512xf32> to vector<4xf32>
    %30 = vector.shape_cast %29 : vector<4xf32> to vector<4x1xf32>
    %31 = arith.mulf %23, %23 : vector<4x512xf32>
    %cst_9 = arith.constant dense<0.000000e+00> : vector<4xf32>
    %32 = vector.multi_reduction <add>, %31, %cst_9 [1] : vector<4x512xf32> to vector<4xf32>
    %33 = vector.shape_cast %32 : vector<4xf32> to vector<4x1xf32>
    %34 = arith.mulf %25, %25 : vector<4x512xf32>
    %cst_10 = arith.constant dense<0.000000e+00> : vector<4xf32>
    %35 = vector.multi_reduction <add>, %34, %cst_10 [1] : vector<4x512xf32> to vector<4xf32>
    %36 = vector.shape_cast %35 : vector<4xf32> to vector<4x1xf32>
    %37 = arith.mulf %27, %27 : vector<4x512xf32>
    %cst_11 = arith.constant dense<0.000000e+00> : vector<4xf32>
    %38 = vector.multi_reduction <add>, %37, %cst_11 [1] : vector<4x512xf32> to vector<4xf32>
    %39 = vector.shape_cast %38 : vector<4xf32> to vector<4x1xf32>
    %40 = arith.addf %30, %33 : vector<4x1xf32>
    %41 = arith.addf %40, %36 : vector<4x1xf32>
    %42 = arith.addf %41, %39 : vector<4x1xf32>
    %cst_12 = arith.constant 4.8828125E-4 : f32
    %43 = vector.broadcast %cst_12 : f32 to vector<4x1xf32>
    %44 = arith.mulf %42, %43 : vector<4x1xf32>
    %cst_13 = arith.constant 9.99999974E-6 : f32
    %45 = vector.broadcast %cst_13 : f32 to vector<4x1xf32>
    %46 = arith.addf %44, %45 : vector<4x1xf32>
    %47 = math.rsqrt %46 : vector<4x1xf32>
    %c0_14 = arith.constant 0 : index
    %c0_15 = arith.constant 0 : index
    %48 = vector.load %arg3[%c0_14, %c0_15] : memref<4x1xf32, #tpu.memory_space<vmem>>, vector<4x1xf32>
    %49 = arith.mulf %47, %48 : vector<4x1xf32>
    %c0_16 = arith.constant 0 : index
    %c0_17 = arith.constant 0 : index
    %50 = vector.load %arg4[%c0_16, %c0_17] : memref<4x1xf32, #tpu.memory_space<vmem>>, vector<4x1xf32>
    %51 = vector.broadcast %49 : vector<4x1xf32> to vector<4x512xf32>
    %52 = arith.mulf %21, %51 : vector<4x512xf32>
    %53 = vector.broadcast %50 : vector<4x1xf32> to vector<4x512xf32>
    %54 = arith.addf %52, %53 : vector<4x512xf32>
    %cst_18 = arith.constant 0.000000e+00 : f32
    %55 = vector.broadcast %cst_18 : f32 to vector<4x512xf32>
    %56 = arith.maximumf %54, %55 : vector<4x512xf32>
    %c0_19 = arith.constant 0 : index
    %c0_20 = arith.constant 0 : index
    %57 = vector.load %arg5[%c0_19, %c0_20] : memref<16x512xf32, #tpu.memory_space<vmem>>, vector<4x512xf32>
    tpu.vector_store %arg5[%c0_19, %c0_20], %56 {strides = array<i32>} : memref<16x512xf32, #tpu.memory_space<vmem>>, vector<4x512xf32>,
    %58 = vector.broadcast %49 : vector<4x1xf32> to vector<4x512xf32>
    %59 = arith.mulf %23, %58 : vector<4x512xf32>
    %60 = vector.broadcast %50 : vector<4x1xf32> to vector<4x512xf32>
    %61 = arith.addf %59, %60 : vector<4x512xf32>
    %cst_21 = arith.constant 0.000000e+00 : f32
    %62 = vector.broadcast %cst_21 : f32 to vector<4x512xf32>
    %63 = arith.maximumf %61, %62 : vector<4x512xf32>
    %c4 = arith.constant 4 : index
    %c0_22 = arith.constant 0 : index
    %64 = vector.load %arg5[%c4, %c0_22] : memref<16x512xf32, #tpu.memory_space<vmem>>, vector<4x512xf32>
    tpu.vector_store %arg5[%c4, %c0_22], %63 {strides = array<i32>} : memref<16x512xf32, #tpu.memory_space<vmem>>, vector<4x512xf32>,
    %65 = vector.broadcast %49 : vector<4x1xf32> to vector<4x512xf32>
    %66 = arith.mulf %25, %65 : vector<4x512xf32>
    %67 = vector.broadcast %50 : vector<4x1xf32> to vector<4x512xf32>
    %68 = arith.addf %66, %67 : vector<4x512xf32>
    %cst_23 = arith.constant 0.000000e+00 : f32
    %69 = vector.broadcast %cst_23 : f32 to vector<4x512xf32>
    %70 = arith.maximumf %68, %69 : vector<4x512xf32>
    %c8 = arith.constant 8 : index
    %c0_24 = arith.constant 0 : index
    %71 = vector.load %arg5[%c8, %c0_24] : memref<16x512xf32, #tpu.memory_space<vmem>>, vector<4x512xf32>
    tpu.vector_store %arg5[%c8, %c0_24], %70 {strides = array<i32>} : memref<16x512xf32, #tpu.memory_space<vmem>>, vector<4x512xf32>,
    %72 = vector.broadcast %49 : vector<4x1xf32> to vector<4x512xf32>
    %73 = arith.mulf %27, %72 : vector<4x512xf32>
    %74 = vector.broadcast %50 : vector<4x1xf32> to vector<4x512xf32>
    %75 = arith.addf %73, %74 : vector<4x512xf32>
    %cst_25 = arith.constant 0.000000e+00 : f32
    %76 = vector.broadcast %cst_25 : f32 to vector<4x512xf32>
    %77 = arith.maximumf %75, %76 : vector<4x512xf32>
    %c12 = arith.constant 12 : index
    %c0_26 = arith.constant 0 : index
    %78 = vector.load %arg5[%c12, %c0_26] : memref<16x512xf32, #tpu.memory_space<vmem>>, vector<4x512xf32>
    tpu.vector_store %arg5[%c12, %c0_26], %77 {strides = array<i32>} : memref<16x512xf32, #tpu.memory_space<vmem>>, vector<4x512xf32>,
    return
  }
  func.func @transform_0(%arg0: i32) -> (i32, i32) {
    %c0_i32 = arith.constant 0 : i32
    %c0_i32_0 = arith.constant 0 : i32
    %c0_i32_1 = arith.constant 0 : i32
    return %c0_i32, %c0_i32_0 : i32, i32
  }
  func.func @transform_1(%arg0: i32) -> (i32, i32) {
    %c0_i32 = arith.constant 0 : i32
    %c0_i32_0 = arith.constant 0 : i32
    %c0_i32_1 = arith.constant 0 : i32
    return %c0_i32, %c0_i32_0 : i32, i32
  }
  func.func @transform_2(%arg0: i32) -> (i32, i32) {
    %c0_i32 = arith.constant 0 : i32
    %c0_i32_0 = arith.constant 0 : i32
    %c0_i32_1 = arith.constant 0 : i32
    return %c0_i32, %c0_i32_0 : i32, i32
  }
  func.func @transform_3(%arg0: i32) -> (i32, i32) {
    %c0_i32 = arith.constant 0 : i32
    %c0_i32_0 = arith.constant 0 : i32
    %c0_i32_1 = arith.constant 0 : i32
    return %c0_i32, %c0_i32_0 : i32, i32
  }
  func.func @transform_4(%arg0: i32) -> (i32, i32) {
    %c0_i32 = arith.constant 0 : i32
    %c0_i32_0 = arith.constant 0 : i32
    %c0_i32_1 = arith.constant 0 : i32
    return %c0_i32, %c0_i32_0 : i32, i32
  }
}

module attributes {stable_mosaic.version = 11 : i64} {
  func.func @_conv_bn_relu_kernel(%arg0: i32, %arg1: memref<72x2048xf32, #tpu.memory_space<vmem>>, %arg2: memref<4x72xf32, #tpu.memory_space<vmem>>, %arg3: memref<4x1xf32, #tpu.memory_space<vmem>>, %arg4: memref<4x1xf32, #tpu.memory_space<vmem>>, %arg5: memref<4x2048xf32, #tpu.memory_space<vmem>>) attributes {dimension_semantics = [#tpu.dimension_semantics<arbitrary>], iteration_bounds = array<i64: 1>, scalar_prefetch = 0 : i64, scratch_operands = 0 : i64, tpu.core_type = #tpu.core_type<tc>, window_params = [{pipeline_mode = #tpu.pipeline_mode<synchronous>, transform_indices = @transform_0, window_bounds = array<i64: 72, 2048>}, {pipeline_mode = #tpu.pipeline_mode<synchronous>, transform_indices = @transform_1, window_bounds = array<i64: 4, 72>}, {pipeline_mode = #tpu.pipeline_mode<synchronous>, transform_indices = @transform_2, window_bounds = array<i64: 4, 1>}, {pipeline_mode = #tpu.pipeline_mode<synchronous>, transform_indices = @transform_3, window_bounds = array<i64: 4, 1>}, {pipeline_mode = #tpu.pipeline_mode<synchronous>, transform_indices = @transform_4, window_bounds = array<i64: 4, 2048>}]} {
    %c0 = arith.constant 0 : index
    %c0_0 = arith.constant 0 : index
    %0 = vector.load %arg2[%c0, %c0_0] : memref<4x72xf32, #tpu.memory_space<vmem>>, vector<4x72xf32>
    %c0_1 = arith.constant 0 : index
    %c0_2 = arith.constant 0 : index
    %1 = vector.load %arg1[%c0_1, %c0_2] : memref<72x2048xf32, #tpu.memory_space<vmem>>, vector<72x2048xf32>
    %cst = arith.constant dense<0.000000e+00> : vector<4x2048xf32>
    %2 = tpu.matmul %0, %1, %cst {dimension_numbers = #tpu.dot_dimension_numbers<[1], [0], [0], [1], [0, 0, 1, 1], [], []>} : vector<4x72xf32>, vector<72x2048xf32>, vector<4x2048xf32> -> vector<4x2048xf32>
    %cst_3 = arith.constant dense<0.000000e+00> : vector<4xf32>
    %3 = vector.multi_reduction <add>, %2, %cst_3 [1] : vector<4x2048xf32> to vector<4xf32>
    %4 = vector.shape_cast %3 : vector<4xf32> to vector<4x1xf32>
    %cst_4 = arith.constant 4.8828125E-4 : f32
    %5 = vector.broadcast %cst_4 : f32 to vector<4x1xf32>
    %6 = arith.mulf %4, %5 : vector<4x1xf32>
    %7 = vector.broadcast %6 : vector<4x1xf32> to vector<4x2048xf32>
    %8 = arith.subf %2, %7 : vector<4x2048xf32>
    %9 = arith.mulf %8, %8 : vector<4x2048xf32>
    %cst_5 = arith.constant dense<0.000000e+00> : vector<4xf32>
    %10 = vector.multi_reduction <add>, %9, %cst_5 [1] : vector<4x2048xf32> to vector<4xf32>
    %11 = vector.shape_cast %10 : vector<4xf32> to vector<4x1xf32>
    %cst_6 = arith.constant 4.8828125E-4 : f32
    %12 = vector.broadcast %cst_6 : f32 to vector<4x1xf32>
    %13 = arith.mulf %11, %12 : vector<4x1xf32>
    %cst_7 = arith.constant 9.99999974E-6 : f32
    %14 = vector.broadcast %cst_7 : f32 to vector<4x1xf32>
    %15 = arith.addf %13, %14 : vector<4x1xf32>
    %16 = math.rsqrt %15 : vector<4x1xf32>
    %c0_8 = arith.constant 0 : index
    %c0_9 = arith.constant 0 : index
    %17 = vector.load %arg3[%c0_8, %c0_9] : memref<4x1xf32, #tpu.memory_space<vmem>>, vector<4x1xf32>
    %18 = arith.mulf %16, %17 : vector<4x1xf32>
    %19 = vector.broadcast %18 : vector<4x1xf32> to vector<4x2048xf32>
    %20 = arith.mulf %8, %19 : vector<4x2048xf32>
    %c0_10 = arith.constant 0 : index
    %c0_11 = arith.constant 0 : index
    %21 = vector.load %arg4[%c0_10, %c0_11] : memref<4x1xf32, #tpu.memory_space<vmem>>, vector<4x1xf32>
    %22 = vector.broadcast %21 : vector<4x1xf32> to vector<4x2048xf32>
    %23 = arith.addf %20, %22 : vector<4x2048xf32>
    %cst_12 = arith.constant 0.000000e+00 : f32
    %24 = vector.broadcast %cst_12 : f32 to vector<4x2048xf32>
    %25 = arith.maximumf %23, %24 : vector<4x2048xf32>
    %c0_13 = arith.constant 0 : index
    %c0_14 = arith.constant 0 : index
    %26 = vector.load %arg5[%c0_13, %c0_14] : memref<4x2048xf32, #tpu.memory_space<vmem>>, vector<4x2048xf32>
    tpu.vector_store %arg5[%c0_13, %c0_14], %25 {strides = array<i32>} : memref<4x2048xf32, #tpu.memory_space<vmem>>, vector<4x2048xf32>,
    return
  }
  func.func @transform_0(%arg0: i32) -> (i32, i32) {
    %c0_i32 = arith.constant 0 : i32
    %c0_i32_0 = arith.constant 0 : i32
    %c0_i32_1 = arith.constant 0 : i32
    return %c0_i32, %c0_i32_0 : i32, i32
  }
  func.func @transform_1(%arg0: i32) -> (i32, i32) {
    %c0_i32 = arith.constant 0 : i32
    %c0_i32_0 = arith.constant 0 : i32
    %c0_i32_1 = arith.constant 0 : i32
    return %c0_i32, %c0_i32_0 : i32, i32
  }
  func.func @transform_2(%arg0: i32) -> (i32, i32) {
    %c0_i32 = arith.constant 0 : i32
    %c0_i32_0 = arith.constant 0 : i32
    %c0_i32_1 = arith.constant 0 : i32
    return %c0_i32, %c0_i32_0 : i32, i32
  }
  func.func @transform_3(%arg0: i32) -> (i32, i32) {
    %c0_i32 = arith.constant 0 : i32
    %c0_i32_0 = arith.constant 0 : i32
    %c0_i32_1 = arith.constant 0 : i32
    return %c0_i32, %c0_i32_0 : i32, i32
  }
  func.func @transform_4(%arg0: i32) -> (i32, i32) {
    %c0_i32 = arith.constant 0 : i32
    %c0_i32_0 = arith.constant 0 : i32
    %c0_i32_1 = arith.constant 0 : i32
    return %c0_i32, %c0_i32_0 : i32, i32
  }
}

</mosaic_0001>

<llo_original>
// kernel: deconv2d_fuse_forward.2
$region0: #{deconv2d_fuse_forward.2}
  #allocation0 [shape = 'u32[]', space=smem, size = 0x4, offset = 0x4, fixed_abs, tag = 'smem constant byte address 0x4 - core index']
  #allocation1 [shape = 'u32[144,128]{1,0:T(1,128)}', space=vmem, size = 0x12000, scoped, tag = 'internal scratch']
  %s0 = inlined_call_operand.vmem [shape: f32[16,512], index: 0, kind: input, shape index: {}]
  %s1 = inlined_call_operand.vmem [shape: f32[16,16], index: 1, kind: input, shape index: {}]
  %s2 = inlined_call_operand.vmem [shape: f32[4,1], index: 2, kind: input, shape index: {}]
  %s3 = inlined_call_operand.vmem [shape: f32[4,1], index: 3, kind: input, shape index: {}]
  %s4 = inlined_call_operand.vmem [shape: f32[16,512], index: 4, kind: output, shape index: {}]
  %s5 = sld [smem:[#allocation0]]
  $region26: #{deconv2d_fuse_forward.2} parent=0
    _
  %s7 = ssub.s32 1, %s5
  %s8 = scalar_select 0, %s7, %s5
  // Predicated region
  $region2: #{deconv2d_fuse_forward.2} parent=0 // pred_check
    _
  $region3: #{deconv2d_fuse_forward.2} parent=0 // pred_check_branch
    %10 = sbr.rel (0) target = $region5
  $region4: #{deconv2d_fuse_forward.2} parent=0 // pred_region
    _
  $region5: #{deconv2d_fuse_forward.2} parent=0 // pred_fallthru
    _
  // Predicated region
  $region6: #{deconv2d_fuse_forward.2} parent=0 // pred_check
    _
  $region7: #{deconv2d_fuse_forward.2} parent=0 // pred_check_branch
    %12 = sbr.rel (0) target = $region9
  $region8: #{deconv2d_fuse_forward.2} parent=0 // pred_region
    _
  $region9: #{deconv2d_fuse_forward.2} parent=0 // pred_fallthru
    _
  // Predicated region
  $region10: #{deconv2d_fuse_forward.2} parent=0 // pred_check
    _
  $region11: #{deconv2d_fuse_forward.2} parent=0 // pred_check_branch
    %14 = sbr.rel (0) target = $region13
  $region12: #{deconv2d_fuse_forward.2} parent=0 // pred_region
    _
  $region13: #{deconv2d_fuse_forward.2} parent=0 // pred_fallthru
    _
  // Predicated region
  $region14: #{deconv2d_fuse_forward.2} parent=0 // pred_check
    _
  $region15: #{deconv2d_fuse_forward.2} parent=0 // pred_check_branch
    %16 = sbr.rel (0) target = $region17
  $region16: #{deconv2d_fuse_forward.2} parent=0 // pred_region
    _
  $region17: #{deconv2d_fuse_forward.2} parent=0 // pred_fallthru
    _
  %v17 = vld [vmem:[%s1] sm:$0xff]
  %v18 = vld [vmem:[%s1 + $0x8] sm:$0xff]
  %v19 = vld [vmem:[%s0] sm:$0xff]
  %v20 = vld [vmem:[%s0 + $0x8] sm:$0xff]
  %v21 = vld [vmem:[%s0 + $0x10] sm:$0xff]
  %v22 = vld [vmem:[%s0 + $0x18] sm:$0xff]
  %v23 = vld [vmem:[%s0 + $0x20] sm:$0xff]
  %v24 = vld [vmem:[%s0 + $0x28] sm:$0xff]
  %v25 = vld [vmem:[%s0 + $0x30] sm:$0xff]
  %v26 = vld [vmem:[%s0 + $0x38] sm:$0xff]
  %vm27 = vcmask 130048
  %v29 = vsel %vm27, %v17, 0
  %v32 = vsel %vm27, %v18, 0
  %34 = vmatprep.subr.mxu0 %v20
  %35 = vmatpush1.msra.mxu0 %v19
  %36 = vmatprep.subr.mxu0 %v24
  %37 = vmatpush1.msra.mxu0 %v23
  %38 = vmatprep.subr.mxu0 0.0
  %39 = vmatpush1.msra.mxu0 0.0
  %40 = vmatprep.subr.mxu0 0.0
  %41 = vmatpush1.msra.mxu0 0.0
  %42 = vmatprep.subr.mxu0 0.0
  %43 = vmatpush1.msra.mxu0 0.0
  %44 = vmatprep.subr.mxu0 0.0
  %45 = vmatpush1.msra.mxu0 0.0
  %46 = vmatprep.subr.mxu0 0.0
  %47 = vmatpush1.msra.mxu0 0.0
  %48 = vmatprep.subr.mxu0 0.0
  %49 = vmatpush1.msra.mxu0 0.0
  %50 = vmatprep.subr.mxu0 0.0
  %51 = vmatpush1.msra.mxu0 0.0
  %52 = vmatprep.subr.mxu0 0.0
  %53 = vmatpush1.msra.mxu0 0.0
  %54 = vmatprep.subr.mxu0 0.0
  %55 = vmatpush1.msra.mxu0 0.0
  %56 = vmatprep.subr.mxu0 0.0
  %57 = vmatpush1.msra.mxu0 0.0
  %58 = vmatprep.subr.mxu0 0.0
  %59 = vmatpush1.msra.mxu0 0.0
  %60 = vmatprep.subr.mxu0 0.0
  %61 = vmatpush1.msra.mxu0 0.0
  %62 = vmatprep.subr.mxu0 0.0
  %63 = vmatpush1.msra.mxu0 0.0
  %64 = vmatprep.subr.mxu0 0.0
  %65 = vmatpush1.msra.mxu0 0.0
  %66 = vmatprep.subr.mxu0 0.0
  %67 = vmatpush1.msra.mxu0 0.0
  %68 = vmatprep.subr.mxu0 0.0
  %69 = vmatpush1.msra.mxu0 0.0
  %70 = vmatprep.subr.mxu0 0.0
  %71 = vmatpush1.msra.mxu0 0.0
  %72 = vmatprep.subr.mxu0 0.0
  %73 = vmatpush1.msra.mxu0 0.0
  %74 = vmatprep.subr.mxu0 0.0
  %75 = vmatpush1.msra.mxu0 0.0
  %76 = vmatprep.subr.mxu0 0.0
  %77 = vmatpush1.msra.mxu0 0.0
  %78 = vmatprep.subr.mxu0 0.0
  %79 = vmatpush1.msra.mxu0 0.0
  %80 = vmatprep.subr.mxu0 0.0
  %81 = vmatpush1.msra.mxu0 0.0
  %82 = vmatprep.subr.mxu0 0.0
  %83 = vmatpush1.msra.mxu0 0.0
  %84 = vmatprep.subr.mxu0 0.0
  %85 = vmatpush1.msra.mxu0 0.0
  %86 = vmatprep.subr.mxu0 0.0
  %87 = vmatpush1.msra.mxu0 0.0
  %88 = vmatprep.subr.mxu0 0.0
  %89 = vmatpush1.msra.mxu0 0.0
  %90 = vmatprep.subr.mxu0 0.0
  %91 = vmatpush1.msra.mxu0 0.0
  %92 = vmatprep.subr.mxu0 0.0
  %93 = vmatpush1.msra.mxu0 0.0
  %94 = vmatprep.subr.mxu0 0.0
  %95 = vmatpush1.msra.mxu0 0.0
  %96 = vmatprep.subr.mxu0 0.0
  %97 = vmatpush1.msra.mxu0 0.0
  %98 = vmatprep.mubr.f32.mxu0 0.0
  %99 = vmatmul.mubr.f32.gmra.mrb[0].mxu0 %v29
  %v100 = vpop.f32.mrb[0].mxu0
  %v101 = vadd.f32 0.0, %v100
  %v102 = vpop.f32.mrb[0].mxu0
  %v103 = vadd.f32 0.0, %v102
  %104 = vmatprep.mubr.f32.mxu0 0.0
  %105 = vmatmul.mubr.f32.gmra.mrb[0].mxu0 %v32
  %v106 = vpop.f32.mrb[0].mxu0
  %v107 = vadd.f32 0.0, %v106
  %v108 = vpop.f32.mrb[0].mxu0
  %v109 = vadd.f32 0.0, %v108
  %110 = vdwg.mxu0
  %111 = vmatprep.subr.mxu0 %v22
  %112 = vmatpush1.msra.mxu0 %v21
  %113 = vmatprep.subr.mxu0 %v26
  %114 = vmatpush1.msra.mxu0 %v25
  %115 = vmatprep.subr.mxu0 0.0
  %116 = vmatpush1.msra.mxu0 0.0
  %117 = vmatprep.subr.mxu0 0.0
  %118 = vmatpush1.msra.mxu0 0.0
  %119 = vmatprep.subr.mxu0 0.0
  %120 = vmatpush1.msra.mxu0 0.0
  %121 = vmatprep.subr.mxu0 0.0
  %122 = vmatpush1.msra.mxu0 0.0
  %123 = vmatprep.subr.mxu0 0.0
  %124 = vmatpush1.msra.mxu0 0.0
  %125 = vmatprep.subr.mxu0 0.0
  %126 = vmatpush1.msra.mxu0 0.0
  %127 = vmatprep.subr.mxu0 0.0
  %128 = vmatpush1.msra.mxu0 0.0
  %129 = vmatprep.subr.mxu0 0.0
  %130 = vmatpush1.msra.mxu0 0.0
  %131 = vmatprep.subr.mxu0 0.0
  %132 = vmatpush1.msra.mxu0 0.0
  %133 = vmatprep.subr.mxu0 0.0
  %134 = vmatpush1.msra.mxu0 0.0
  %135 = vmatprep.subr.mxu0 0.0
  %136 = vmatpush1.msra.mxu0 0.0
  %137 = vmatprep.subr.mxu0 0.0
  %138 = vmatpush1.msra.mxu0 0.0
  %139 = vmatprep.subr.mxu0 0.0
  %140 = vmatpush1.msra.mxu0 0.0
  %141 = vmatprep.subr.mxu0 0.0
  %142 = vmatpush1.msra.mxu0 0.0
  %143 = vmatprep.subr.mxu0 0.0
  %144 = vmatpush1.msra.mxu0 0.0
  %145 = vmatprep.subr.mxu0 0.0
  %146 = vmatpush1.msra.mxu0 0.0
  %147 = vmatprep.subr.mxu0 0.0
  %148 = vmatpush1.msra.mxu0 0.0
  %149 = vmatprep.subr.mxu0 0.0
  %150 = vmatpush1.msra.mxu0 0.0
  %151 = vmatprep.subr.mxu0 0.0
  %152 = vmatpush1.msra.mxu0 0.0
  %153 = vmatprep.subr.mxu0 0.0
  %154 = vmatpush1.msra.mxu0 0.0
  %155 = vmatprep.subr.mxu0 0.0
  %156 = vmatpush1.msra.mxu0 0.0
  %157 = vmatprep.subr.mxu0 0.0
  %158 = vmatpush1.msra.mxu0 0.0
  %159 = vmatprep.subr.mxu0 0.0
  %160 = vmatpush1.msra.mxu0 0.0
  %161 = vmatprep.subr.mxu0 0.0
  %162 = vmatpush1.msra.mxu0 0.0
  %163 = vmatprep.subr.mxu0 0.0
  %164 = vmatpush1.msra.mxu0 0.0
  %165 = vmatprep.subr.mxu0 0.0
  %166 = vmatpush1.msra.mxu0 0.0
  %167 = vmatprep.subr.mxu0 0.0
  %168 = vmatpush1.msra.mxu0 0.0
  %169 = vmatprep.subr.mxu0 0.0
  %170 = vmatpush1.msra.mxu0 0.0
  %171 = vmatprep.subr.mxu0 0.0
  %172 = vmatpush1.msra.mxu0 0.0
  %173 = vmatprep.subr.mxu0 0.0
  %174 = vmatpush1.msra.mxu0 0.0
  %175 = vmatprep.mubr.f32.mxu0 0.0
  %176 = vmatmul.mubr.f32.gmra.mrb[0].mxu0 %v29
  %v177 = vpop.f32.mrb[0].mxu0
  %v178 = vadd.f32 0.0, %v177
  %v179 = vpop.f32.mrb[0].mxu0
  %v180 = vadd.f32 0.0, %v179
  %181 = vmatprep.mubr.f32.mxu0 0.0
  %182 = vmatmul.mubr.f32.gmra.mrb[0].mxu0 %v32
  %v183 = vpop.f32.mrb[0].mxu0
  %v184 = vadd.f32 0.0, %v183
  %v185 = vpop.f32.mrb[0].mxu0
  %v186 = vadd.f32 0.0, %v185
  %187 = vdwg.mxu0
  %vm188 = vcmask 1043456
  %v189 = vsel %vm188, %v101, 0.0
  %v190 = vsel %vm188, %v103, 0.0
  %v191 = vadd.f32 %v189, %v190
  %v192 = vsel %vm188, %v178, 0.0
  %v193 = vadd.f32 %v191, %v192
  %v194 = vsel %vm188, %v180, 0.0
  %v195 = vadd.f32 %v193, %v194
  %196 = vadd.xlane.f32.xlu0 %v195
  %v197 = vpop.xlane.xlu0 %196
  %vm198 = vcmask 1047556
  %v199 = vsel %vm198, %v101, 0.0
  %v200 = vsel %vm198, %v103, 0.0
  %v201 = vadd.f32 %v199, %v200
  %v202 = vsel %vm198, %v178, 0.0
  %v203 = vadd.f32 %v201, %v202
  %v204 = vsel %vm198, %v180, 0.0
  %v205 = vadd.f32 %v203, %v204
  %206 = vadd.xlane.f32.xlu0 %v205
  %v207 = vpop.xlane.xlu0 %206
  %v208 = vsel %vm188, %v107, 0.0
  %v209 = vsel %vm188, %v109, 0.0
  %v210 = vadd.f32 %v208, %v209
  %v211 = vsel %vm188, %v184, 0.0
  %v212 = vadd.f32 %v210, %v211
  %v213 = vsel %vm188, %v186, 0.0
  %v214 = vadd.f32 %v212, %v213
  %215 = vadd.xlane.f32.xlu0 %v214
  %v216 = vpop.xlane.xlu0 %215
  %v217 = vsel %vm198, %v107, 0.0
  %v218 = vsel %vm198, %v109, 0.0
  %v219 = vadd.f32 %v217, %v218
  %v220 = vsel %vm198, %v184, 0.0
  %v221 = vadd.f32 %v219, %v220
  %v222 = vsel %vm198, %v186, 0.0
  %v223 = vadd.f32 %v221, %v222
  %224 = vadd.xlane.f32.xlu0 %v223
  %v225 = vpop.xlane.xlu0 %224
  %v227 = vrot.slane %v207, 4
  %v229 = vadd.f32 %v197, %v227
  %v230 = vadd.f32 %v229, %v216
  %v232 = vrot.slane %v225, 4
  %v234 = vadd.f32 %v230, %v232
  %v235 = vmul.f32 %v234, 0.00048828125
  %237 = vset.pattern.permute.xlu0 0
  %238 = vperm.xlu0 %237, %v235
  %v239 = vpop.permute.xlu0 %238
  %v241 = vsub.f32 %v101, %v239
  %v242 = vsub.f32 %v103, %v239
  %v243 = vsub.f32 %v178, %v239
  %v244 = vsub.f32 %v180, %v239
  %v245 = vrot.slane %v239, 4
  %v247 = vsub.f32 %v101, %v245
  %v248 = vsub.f32 %v103, %v245
  %v249 = vsub.f32 %v178, %v245
  %v250 = vsub.f32 %v180, %v245
  %v251 = vsub.f32 %v107, %v239
  %v252 = vsub.f32 %v109, %v239
  %v253 = vsub.f32 %v184, %v239
  %v254 = vsub.f32 %v186, %v239
  %v255 = vsub.f32 %v107, %v245
  %v256 = vsub.f32 %v109, %v245
  %v257 = vsub.f32 %v184, %v245
  %v258 = vsub.f32 %v186, %v245
  %v259 = vmul.f32 %v241, %v241
  %v260 = vmul.f32 %v242, %v242
  %v261 = vmul.f32 %v243, %v243
  %v262 = vmul.f32 %v244, %v244
  %v263 = vsel %vm188, %v259, 0.0
  %v264 = vsel %vm188, %v260, 0.0
  %v265 = vadd.f32 %v263, %v264
  %v266 = vsel %vm188, %v261, 0.0
  %v267 = vadd.f32 %v265, %v266
  %v268 = vsel %vm188, %v262, 0.0
  %v269 = vadd.f32 %v267, %v268
  %270 = vadd.xlane.f32.xlu0 %v269
  %v271 = vpop.xlane.xlu0 %270
  %v272 = vmul.f32 %v247, %v247
  %v273 = vmul.f32 %v248, %v248
  %v274 = vmul.f32 %v249, %v249
  %v275 = vmul.f32 %v250, %v250
  %v276 = vsel %vm198, %v272, 0.0
  %v277 = vsel %vm198, %v273, 0.0
  %v278 = vadd.f32 %v276, %v277
  %v279 = vsel %vm198, %v274, 0.0
  %v280 = vadd.f32 %v278, %v279
  %v281 = vsel %vm198, %v275, 0.0
  %v282 = vadd.f32 %v280, %v281
  %283 = vadd.xlane.f32.xlu0 %v282
  %v284 = vpop.xlane.xlu0 %283
  %v285 = vmul.f32 %v251, %v251
  %v286 = vmul.f32 %v252, %v252
  %v287 = vmul.f32 %v253, %v253
  %v288 = vmul.f32 %v254, %v254
  %v289 = vsel %vm188, %v285, 0.0
  %v290 = vsel %vm188, %v286, 0.0
  %v291 = vadd.f32 %v289, %v290
  %v292 = vsel %vm188, %v287, 0.0
  %v293 = vadd.f32 %v291, %v292
  %v294 = vsel %vm188, %v288, 0.0
  %v295 = vadd.f32 %v293, %v294
  %296 = vadd.xlane.f32.xlu0 %v295
  %v297 = vpop.xlane.xlu0 %296
  %v298 = vmul.f32 %v255, %v255
  %v299 = vmul.f32 %v256, %v256
  %v300 = vmul.f32 %v257, %v257
  %v301 = vmul.f32 %v258, %v258
  %v302 = vsel %vm198, %v298, 0.0
  %v303 = vsel %vm198, %v299, 0.0
  %v304 = vadd.f32 %v302, %v303
  %v305 = vsel %vm198, %v300, 0.0
  %v306 = vadd.f32 %v304, %v305
  %v307 = vsel %vm198, %v301, 0.0
  %v308 = vadd.f32 %v306, %v307
  %309 = vadd.xlane.f32.xlu0 %v308
  %v310 = vpop.xlane.xlu0 %309
  %v312 = vrot.slane %v284, 4
  %v314 = vadd.f32 %v271, %v312
  %v315 = vadd.f32 %v314, %v297
  %v317 = vrot.slane %v310, 4
  %v319 = vadd.f32 %v315, %v317
  %v320 = vmul.f32 %v319, 0.00048828125
  %v321 = vadd.f32 %v320, 1e-05
  %v322 = vrsqrt.pop %v321
  %v323 = vld [vmem:[%s2] sm:$0xf]
  %v324 = vmul.f32 %v322, %v323
  %v325 = vld [vmem:[%s3] sm:$0xf]
  %327 = vset.pattern.permute.xlu0 0
  %328 = vperm.xlu0 %327, %v324
  %v329 = vpop.permute.xlu0 %328
  %v331 = vmul.f32 %v241, %v329
  %v332 = vmul.f32 %v242, %v329
  %v333 = vmul.f32 %v243, %v329
  %v334 = vmul.f32 %v244, %v329
  %336 = vset.pattern.permute.xlu0 0
  %337 = vperm.xlu0 %336, %v325
  %v338 = vpop.permute.xlu0 %337
  %v340 = vadd.f32 %v331, %v338
  %v341 = vadd.f32 %v332, %v338
  %v342 = vadd.f32 %v333, %v338
  %v343 = vadd.f32 %v334, %v338
  %v344 = vmax.f32 %v340, 0.0
  %v345 = vmax.f32 %v341, 0.0
  %v346 = vmax.f32 %v342, 0.0
  %v347 = vmax.f32 %v343, 0.0
  %348 = vst [vmem:[%s4] sm:$0xf] %v344
  %349 = vst [vmem:[%s4 + $0x8] sm:$0xf] %v345
  %350 = vst [vmem:[%s4 + $0x10] sm:$0xf] %v346
  %351 = vst [vmem:[%s4 + $0x18] sm:$0xf] %v347
  %v352 = vrot.slane %v329, 4
  %v354 = vmul.f32 %v247, %v352
  %v355 = vmul.f32 %v248, %v352
  %v356 = vmul.f32 %v249, %v352
  %v357 = vmul.f32 %v250, %v352
  %v358 = vrot.slane %v338, 4
  %v360 = vadd.f32 %v354, %v358
  %v361 = vadd.f32 %v355, %v358
  %v362 = vadd.f32 %v356, %v358
  %v363 = vadd.f32 %v357, %v358
  %v364 = vmax.f32 %v360, 0.0
  %v365 = vmax.f32 %v361, 0.0
  %v366 = vmax.f32 %v362, 0.0
  %v367 = vmax.f32 %v363, 0.0
  %368 = vst [vmem:[%s4] sm:$0xf0] %v364
  %369 = vst [vmem:[%s4 + $0x8] sm:$0xf0] %v365
  %370 = vst [vmem:[%s4 + $0x10] sm:$0xf0] %v366
  %371 = vst [vmem:[%s4 + $0x18] sm:$0xf0] %v367
  %v372 = vmul.f32 %v251, %v329
  %v373 = vmul.f32 %v252, %v329
  %v374 = vmul.f32 %v253, %v329
  %v375 = vmul.f32 %v254, %v329
  %v376 = vadd.f32 %v372, %v338
  %v377 = vadd.f32 %v373, %v338
  %v378 = vadd.f32 %v374, %v338
  %v379 = vadd.f32 %v375, %v338
  %v380 = vmax.f32 %v376, 0.0
  %v381 = vmax.f32 %v377, 0.0
  %v382 = vmax.f32 %v378, 0.0
  %v383 = vmax.f32 %v379, 0.0
  %384 = vst [vmem:[%s4 + $0x20] sm:$0xf] %v380
  %385 = vst [vmem:[%s4 + $0x28] sm:$0xf] %v381
  %386 = vst [vmem:[%s4 + $0x30] sm:$0xf] %v382
  %387 = vst [vmem:[%s4 + $0x38] sm:$0xf] %v383
  %v388 = vmul.f32 %v255, %v352
  %v389 = vmul.f32 %v256, %v352
  %v390 = vmul.f32 %v257, %v352
  %v391 = vmul.f32 %v258, %v352
  %v392 = vadd.f32 %v388, %v358
  %v393 = vadd.f32 %v389, %v358
  %v394 = vadd.f32 %v390, %v358
  %v395 = vadd.f32 %v391, %v358
  %v396 = vmax.f32 %v392, 0.0
  %v397 = vmax.f32 %v393, 0.0
  %v398 = vmax.f32 %v394, 0.0
  %v399 = vmax.f32 %v395, 0.0
  %400 = vst [vmem:[%s4 + $0x20] sm:$0xf0] %v396
  %401 = vst [vmem:[%s4 + $0x28] sm:$0xf0] %v397
  %402 = vst [vmem:[%s4 + $0x30] sm:$0xf0] %v398
  %403 = vst [vmem:[%s4 + $0x38] sm:$0xf0] %v399
  // Predicated region
  $region18: #{deconv2d_fuse_forward.2} parent=0 // pred_check
    _
  $region19: #{deconv2d_fuse_forward.2} parent=0 // pred_check_branch
    %405 = sbr.rel (0) target = $region21
  $region20: #{deconv2d_fuse_forward.2} parent=0 // pred_region
    _
  $region21: #{deconv2d_fuse_forward.2} parent=0 // pred_fallthru
    _
  // Predicated region
  $region22: #{deconv2d_fuse_forward.2} parent=0 // pred_check
    _
  $region23: #{deconv2d_fuse_forward.2} parent=0 // pred_check_branch
    %407 = sbr.rel (0) target = $region25
  $region24: #{deconv2d_fuse_forward.2} parent=0 // pred_region
    _
  $region25: #{deconv2d_fuse_forward.2} parent=0 // pred_fallthru
    _

// kernel: deconv2d_fuse_forward.3
$region0: #{deconv2d_fuse_forward.3}
  #allocation0 [shape = 'u32[]', space=smem, size = 0x4, offset = 0x4, fixed_abs, tag = 'smem constant byte address 0x4 - core index']
  #allocation1 [shape = 'u32[144,128]{1,0:T(1,128)}', space=vmem, size = 0x12000, scoped, tag = 'internal scratch']
  %s0 = inlined_call_operand.vmem [shape: f32[72,2048], index: 0, kind: input, shape index: {}]
  %s1 = inlined_call_operand.vmem [shape: f32[4,72], index: 1, kind: input, shape index: {}]
  %s2 = inlined_call_operand.vmem [shape: f32[4,1], index: 2, kind: input, shape index: {}]
  %s3 = inlined_call_operand.vmem [shape: f32[4,1], index: 3, kind: input, shape index: {}]
  %s4 = inlined_call_operand.vmem [shape: f32[4,2048], index: 4, kind: output, shape index: {}]
  %s5 = sld [smem:[#allocation0]]
  $region26: #{deconv2d_fuse_forward.3} parent=0
    _
  %s7 = ssub.s32 1, %s5
  %s8 = scalar_select 0, %s7, %s5
  // Predicated region
  $region2: #{deconv2d_fuse_forward.3} parent=0 // pred_check
    _
  $region3: #{deconv2d_fuse_forward.3} parent=0 // pred_check_branch
    %10 = sbr.rel (0) target = $region5
  $region4: #{deconv2d_fuse_forward.3} parent=0 // pred_region
    _
  $region5: #{deconv2d_fuse_forward.3} parent=0 // pred_fallthru
    _
  // Predicated region
  $region6: #{deconv2d_fuse_forward.3} parent=0 // pred_check
    _
  $region7: #{deconv2d_fuse_forward.3} parent=0 // pred_check_branch
    %12 = sbr.rel (0) target = $region9
  $region8: #{deconv2d_fuse_forward.3} parent=0 // pred_region
    _
  $region9: #{deconv2d_fuse_forward.3} parent=0 // pred_fallthru
    _
  // Predicated region
  $region10: #{deconv2d_fuse_forward.3} parent=0 // pred_check
    _
  $region11: #{deconv2d_fuse_forward.3} parent=0 // pred_check_branch
    %14 = sbr.rel (0) target = $region13
  $region12: #{deconv2d_fuse_forward.3} parent=0 // pred_region
    _
  $region13: #{deconv2d_fuse_forward.3} parent=0 // pred_fallthru
    _
  // Predicated region
  $region14: #{deconv2d_fuse_forward.3} parent=0 // pred_check
    _
  $region15: #{deconv2d_fuse_forward.3} parent=0 // pred_check_branch
    %16 = sbr.rel (0) target = $region17
  $region16: #{deconv2d_fuse_forward.3} parent=0 // pred_region
    _
  $region17: #{deconv2d_fuse_forward.3} parent=0 // pred_fallthru
    _
  %v17 = vld [vmem:[%s1] sm:$0xf]
  %v18 = vld [vmem:[%s0] sm:$0xff]
  %v19 = vld [vmem:[%s0 + $0x8] sm:$0xff]
  %v20 = vld [vmem:[%s0 + $0x10] sm:$0xff]
  %v21 = vld [vmem:[%s0 + $0x18] sm:$0xff]
  %v22 = vld [vmem:[%s0 + $0x20] sm:$0xff]
  %v23 = vld [vmem:[%s0 + $0x28] sm:$0xff]
  %v24 = vld [vmem:[%s0 + $0x30] sm:$0xff]
  %v25 = vld [vmem:[%s0 + $0x38] sm:$0xff]
  %v26 = vld [vmem:[%s0 + $0x40] sm:$0xff]
  %v27 = vld [vmem:[%s0 + $0x48] sm:$0xff]
  %v28 = vld [vmem:[%s0 + $0x50] sm:$0xff]
  %v29 = vld [vmem:[%s0 + $0x58] sm:$0xff]
  %v30 = vld [vmem:[%s0 + $0x60] sm:$0xff]
  %v31 = vld [vmem:[%s0 + $0x68] sm:$0xff]
  %v32 = vld [vmem:[%s0 + $0x70] sm:$0xff]
  %v33 = vld [vmem:[%s0 + $0x78] sm:$0xff]
  %v34 = vld [vmem:[%s0 + $0x80] sm:$0xff]
  %v35 = vld [vmem:[%s0 + $0x88] sm:$0xff]
  %v36 = vld [vmem:[%s0 + $0x90] sm:$0xff]
  %v37 = vld [vmem:[%s0 + $0x98] sm:$0xff]
  %v38 = vld [vmem:[%s0 + $0xa0] sm:$0xff]
  %v39 = vld [vmem:[%s0 + $0xa8] sm:$0xff]
  %v40 = vld [vmem:[%s0 + $0xb0] sm:$0xff]
  %v41 = vld [vmem:[%s0 + $0xb8] sm:$0xff]
  %v42 = vld [vmem:[%s0 + $0xc0] sm:$0xff]
  %v43 = vld [vmem:[%s0 + $0xc8] sm:$0xff]
  %v44 = vld [vmem:[%s0 + $0xd0] sm:$0xff]
  %v45 = vld [vmem:[%s0 + $0xd8] sm:$0xff]
  %v46 = vld [vmem:[%s0 + $0xe0] sm:$0xff]
  %v47 = vld [vmem:[%s0 + $0xe8] sm:$0xff]
  %v48 = vld [vmem:[%s0 + $0xf0] sm:$0xff]
  %v49 = vld [vmem:[%s0 + $0xf8] sm:$0xff]
  %v50 = vld [vmem:[%s0 + $0x100] sm:$0xff]
  %v51 = vld [vmem:[%s0 + $0x108] sm:$0xff]
  %v52 = vld [vmem:[%s0 + $0x110] sm:$0xff]
  %v53 = vld [vmem:[%s0 + $0x118] sm:$0xff]
  %v54 = vld [vmem:[%s0 + $0x120] sm:$0xff]
  %v55 = vld [vmem:[%s0 + $0x128] sm:$0xff]
  %v56 = vld [vmem:[%s0 + $0x130] sm:$0xff]
  %v57 = vld [vmem:[%s0 + $0x138] sm:$0xff]
  %v58 = vld [vmem:[%s0 + $0x140] sm:$0xff]
  %v59 = vld [vmem:[%s0 + $0x148] sm:$0xff]
  %v60 = vld [vmem:[%s0 + $0x150] sm:$0xff]
  %v61 = vld [vmem:[%s0 + $0x158] sm:$0xff]
  %v62 = vld [vmem:[%s0 + $0x160] sm:$0xff]
  %v63 = vld [vmem:[%s0 + $0x168] sm:$0xff]
  %v64 = vld [vmem:[%s0 + $0x170] sm:$0xff]
  %v65 = vld [vmem:[%s0 + $0x178] sm:$0xff]
  %v66 = vld [vmem:[%s0 + $0x180] sm:$0xff]
  %v67 = vld [vmem:[%s0 + $0x188] sm:$0xff]
  %v68 = vld [vmem:[%s0 + $0x190] sm:$0xff]
  %v69 = vld [vmem:[%s0 + $0x198] sm:$0xff]
  %v70 = vld [vmem:[%s0 + $0x1a0] sm:$0xff]
  %v71 = vld [vmem:[%s0 + $0x1a8] sm:$0xff]
  %v72 = vld [vmem:[%s0 + $0x1b0] sm:$0xff]
  %v73 = vld [vmem:[%s0 + $0x1b8] sm:$0xff]
  %v74 = vld [vmem:[%s0 + $0x1c0] sm:$0xff]
  %v75 = vld [vmem:[%s0 + $0x1c8] sm:$0xff]
  %v76 = vld [vmem:[%s0 + $0x1d0] sm:$0xff]
  %v77 = vld [vmem:[%s0 + $0x1d8] sm:$0xff]
  %v78 = vld [vmem:[%s0 + $0x1e0] sm:$0xff]
  %v79 = vld [vmem:[%s0 + $0x1e8] sm:$0xff]
  %v80 = vld [vmem:[%s0 + $0x1f0] sm:$0xff]
  %v81 = vld [vmem:[%s0 + $0x1f8] sm:$0xff]
  %v82 = vld [vmem:[%s0 + $0x200] sm:$0xff]
  %v83 = vld [vmem:[%s0 + $0x208] sm:$0xff]
  %v84 = vld [vmem:[%s0 + $0x210] sm:$0xff]
  %v85 = vld [vmem:[%s0 + $0x218] sm:$0xff]
  %v86 = vld [vmem:[%s0 + $0x220] sm:$0xff]
  %v87 = vld [vmem:[%s0 + $0x228] sm:$0xff]
  %v88 = vld [vmem:[%s0 + $0x230] sm:$0xff]
  %v89 = vld [vmem:[%s0 + $0x238] sm:$0xff]
  %v90 = vld [vmem:[%s0 + $0x240] sm:$0xff]
  %v91 = vld [vmem:[%s0 + $0x248] sm:$0xff]
  %v92 = vld [vmem:[%s0 + $0x250] sm:$0xff]
  %v93 = vld [vmem:[%s0 + $0x258] sm:$0xff]
  %v94 = vld [vmem:[%s0 + $0x260] sm:$0xff]
  %v95 = vld [vmem:[%s0 + $0x268] sm:$0xff]
  %v96 = vld [vmem:[%s0 + $0x270] sm:$0xff]
  %v97 = vld [vmem:[%s0 + $0x278] sm:$0xff]
  %v98 = vld [vmem:[%s0 + $0x280] sm:$0xff]
  %v99 = vld [vmem:[%s0 + $0x288] sm:$0xff]
  %v100 = vld [vmem:[%s0 + $0x290] sm:$0xff]
  %v101 = vld [vmem:[%s0 + $0x298] sm:$0xff]
  %v102 = vld [vmem:[%s0 + $0x2a0] sm:$0xff]
  %v103 = vld [vmem:[%s0 + $0x2a8] sm:$0xff]
  %v104 = vld [vmem:[%s0 + $0x2b0] sm:$0xff]
  %v105 = vld [vmem:[%s0 + $0x2b8] sm:$0xff]
  %v106 = vld [vmem:[%s0 + $0x2c0] sm:$0xff]
  %v107 = vld [vmem:[%s0 + $0x2c8] sm:$0xff]
  %v108 = vld [vmem:[%s0 + $0x2d0] sm:$0xff]
  %v109 = vld [vmem:[%s0 + $0x2d8] sm:$0xff]
  %v110 = vld [vmem:[%s0 + $0x2e0] sm:$0xff]
  %v111 = vld [vmem:[%s0 + $0x2e8] sm:$0xff]
  %v112 = vld [vmem:[%s0 + $0x2f0] sm:$0xff]
  %v113 = vld [vmem:[%s0 + $0x2f8] sm:$0xff]
  %v114 = vld [vmem:[%s0 + $0x300] sm:$0xff]
  %v115 = vld [vmem:[%s0 + $0x308] sm:$0xff]
  %v116 = vld [vmem:[%s0 + $0x310] sm:$0xff]
  %v117 = vld [vmem:[%s0 + $0x318] sm:$0xff]
  %v118 = vld [vmem:[%s0 + $0x320] sm:$0xff]
  %v119 = vld [vmem:[%s0 + $0x328] sm:$0xff]
  %v120 = vld [vmem:[%s0 + $0x330] sm:$0xff]
  %v121 = vld [vmem:[%s0 + $0x338] sm:$0xff]
  %v122 = vld [vmem:[%s0 + $0x340] sm:$0xff]
  %v123 = vld [vmem:[%s0 + $0x348] sm:$0xff]
  %v124 = vld [vmem:[%s0 + $0x350] sm:$0xff]
  %v125 = vld [vmem:[%s0 + $0x358] sm:$0xff]
  %v126 = vld [vmem:[%s0 + $0x360] sm:$0xff]
  %v127 = vld [vmem:[%s0 + $0x368] sm:$0xff]
  %v128 = vld [vmem:[%s0 + $0x370] sm:$0xff]
  %v129 = vld [vmem:[%s0 + $0x378] sm:$0xff]
  %v130 = vld [vmem:[%s0 + $0x380] sm:$0xff]
  %v131 = vld [vmem:[%s0 + $0x388] sm:$0xff]
  %v132 = vld [vmem:[%s0 + $0x390] sm:$0xff]
  %v133 = vld [vmem:[%s0 + $0x398] sm:$0xff]
  %v134 = vld [vmem:[%s0 + $0x3a0] sm:$0xff]
  %v135 = vld [vmem:[%s0 + $0x3a8] sm:$0xff]
  %v136 = vld [vmem:[%s0 + $0x3b0] sm:$0xff]
  %v137 = vld [vmem:[%s0 + $0x3b8] sm:$0xff]
  %v138 = vld [vmem:[%s0 + $0x3c0] sm:$0xff]
  %v139 = vld [vmem:[%s0 + $0x3c8] sm:$0xff]
  %v140 = vld [vmem:[%s0 + $0x3d0] sm:$0xff]
  %v141 = vld [vmem:[%s0 + $0x3d8] sm:$0xff]
  %v142 = vld [vmem:[%s0 + $0x3e0] sm:$0xff]
  %v143 = vld [vmem:[%s0 + $0x3e8] sm:$0xff]
  %v144 = vld [vmem:[%s0 + $0x3f0] sm:$0xff]
  %v145 = vld [vmem:[%s0 + $0x3f8] sm:$0xff]
  %v146 = vld [vmem:[%s0 + $0x400] sm:$0xff]
  %v147 = vld [vmem:[%s0 + $0x408] sm:$0xff]
  %v148 = vld [vmem:[%s0 + $0x410] sm:$0xff]
  %v149 = vld [vmem:[%s0 + $0x418] sm:$0xff]
  %v150 = vld [vmem:[%s0 + $0x420] sm:$0xff]
  %v151 = vld [vmem:[%s0 + $0x428] sm:$0xff]
  %v152 = vld [vmem:[%s0 + $0x430] sm:$0xff]
  %v153 = vld [vmem:[%s0 + $0x438] sm:$0xff]
  %v154 = vld [vmem:[%s0 + $0x440] sm:$0xff]
  %v155 = vld [vmem:[%s0 + $0x448] sm:$0xff]
  %v156 = vld [vmem:[%s0 + $0x450] sm:$0xff]
  %v157 = vld [vmem:[%s0 + $0x458] sm:$0xff]
  %v158 = vld [vmem:[%s0 + $0x460] sm:$0xff]
  %v159 = vld [vmem:[%s0 + $0x468] sm:$0xff]
  %v160 = vld [vmem:[%s0 + $0x470] sm:$0xff]
  %v161 = vld [vmem:[%s0 + $0x478] sm:$0xff]
  %vm162 = vcmask 588800
  %v164 = vsel %vm162, %v17, 0
  %166 = vmatprep.subr.mxu0 %v19
  %167 = vmatpush1.msra.mxu0 %v18
  %168 = vmatprep.subr.mxu0 %v35
  %169 = vmatpush1.msra.mxu0 %v34
  %170 = vmatprep.subr.mxu0 %v51
  %171 = vmatpush1.msra.mxu0 %v50
  %172 = vmatprep.subr.mxu0 %v67
  %173 = vmatpush1.msra.mxu0 %v66
  %174 = vmatprep.subr.mxu0 %v83
  %175 = vmatpush1.msra.mxu0 %v82
  %176 = vmatprep.subr.mxu0 %v99
  %177 = vmatpush1.msra.mxu0 %v98
  %178 = vmatprep.subr.mxu0 %v115
  %179 = vmatpush1.msra.mxu0 %v114
  %180 = vmatprep.subr.mxu0 %v131
  %181 = vmatpush1.msra.mxu0 %v130
  %182 = vmatprep.subr.mxu0 %v147
  %183 = vmatpush1.msra.mxu0 %v146
  %184 = vmatprep.subr.mxu0 0.0
  %185 = vmatpush1.msra.mxu0 0.0
  %186 = vmatprep.subr.mxu0 0.0
  %187 = vmatpush1.msra.mxu0 0.0
  %188 = vmatprep.subr.mxu0 0.0
  %189 = vmatpush1.msra.mxu0 0.0
  %190 = vmatprep.subr.mxu0 0.0
  %191 = vmatpush1.msra.mxu0 0.0
  %192 = vmatprep.subr.mxu0 0.0
  %193 = vmatpush1.msra.mxu0 0.0
  %194 = vmatprep.subr.mxu0 0.0
  %195 = vmatpush1.msra.mxu0 0.0
  %196 = vmatprep.subr.mxu0 0.0
  %197 = vmatpush1.msra.mxu0 0.0
  %198 = vmatprep.subr.mxu0 0.0
  %199 = vmatpush1.msra.mxu0 0.0
  %200 = vmatprep.subr.mxu0 0.0
  %201 = vmatpush1.msra.mxu0 0.0
  %202 = vmatprep.subr.mxu0 0.0
  %203 = vmatpush1.msra.mxu0 0.0
  %204 = vmatprep.subr.mxu0 0.0
  %205 = vmatpush1.msra.mxu0 0.0
  %206 = vmatprep.subr.mxu0 0.0
  %207 = vmatpush1.msra.mxu0 0.0
  %208 = vmatprep.subr.mxu0 0.0
  %209 = vmatpush1.msra.mxu0 0.0
  %210 = vmatprep.subr.mxu0 0.0
  %211 = vmatpush1.msra.mxu0 0.0
  %212 = vmatprep.subr.mxu0 0.0
  %213 = vmatpush1.msra.mxu0 0.0
  %214 = vmatprep.subr.mxu0 0.0
  %215 = vmatpush1.msra.mxu0 0.0
  %216 = vmatprep.subr.mxu0 0.0
  %217 = vmatpush1.msra.mxu0 0.0
  %218 = vmatprep.subr.mxu0 0.0
  %219 = vmatpush1.msra.mxu0 0.0
  %220 = vmatprep.subr.mxu0 0.0
  %221 = vmatpush1.msra.mxu0 0.0
  %222 = vmatprep.subr.mxu0 0.0
  %223 = vmatpush1.msra.mxu0 0.0
  %224 = vmatprep.subr.mxu0 0.0
  %225 = vmatpush1.msra.mxu0 0.0
  %226 = vmatprep.subr.mxu0 0.0
  %227 = vmatpush1.msra.mxu0 0.0
  %228 = vmatprep.subr.mxu0 0.0
  %229 = vmatpush1.msra.mxu0 0.0
  %230 = vmatprep.mubr.f32.mxu0 0.0
  %231 = vmatmul.mubr.f32.gmra.mrb[0].mxu0 %v164
  %v232 = vpop.f32.mrb[0].mxu0
  %v233 = vadd.f32 0.0, %v232
  %v234 = vpop.f32.mrb[0].mxu0
  %v235 = vadd.f32 0.0, %v234
  %236 = vdwg.mxu0
  %237 = vmatprep.subr.mxu0 %v21
  %238 = vmatpush1.msra.mxu0 %v20
  %239 = vmatprep.subr.mxu0 %v37
  %240 = vmatpush1.msra.mxu0 %v36
  %241 = vmatprep.subr.mxu0 %v53
  %242 = vmatpush1.msra.mxu0 %v52
  %243 = vmatprep.subr.mxu0 %v69
  %244 = vmatpush1.msra.mxu0 %v68
  %245 = vmatprep.subr.mxu0 %v85
  %246 = vmatpush1.msra.mxu0 %v84
  %247 = vmatprep.subr.mxu0 %v101
  %248 = vmatpush1.msra.mxu0 %v100
  %249 = vmatprep.subr.mxu0 %v117
  %250 = vmatpush1.msra.mxu0 %v116
  %251 = vmatprep.subr.mxu0 %v133
  %252 = vmatpush1.msra.mxu0 %v132
  %253 = vmatprep.subr.mxu0 %v149
  %254 = vmatpush1.msra.mxu0 %v148
  %255 = vmatprep.subr.mxu0 0.0
  %256 = vmatpush1.msra.mxu0 0.0
  %257 = vmatprep.subr.mxu0 0.0
  %258 = vmatpush1.msra.mxu0 0.0
  %259 = vmatprep.subr.mxu0 0.0
  %260 = vmatpush1.msra.mxu0 0.0
  %261 = vmatprep.subr.mxu0 0.0
  %262 = vmatpush1.msra.mxu0 0.0
  %263 = vmatprep.subr.mxu0 0.0
  %264 = vmatpush1.msra.mxu0 0.0
  %265 = vmatprep.subr.mxu0 0.0
  %266 = vmatpush1.msra.mxu0 0.0
  %267 = vmatprep.subr.mxu0 0.0
  %268 = vmatpush1.msra.mxu0 0.0
  %269 = vmatprep.subr.mxu0 0.0
  %270 = vmatpush1.msra.mxu0 0.0
  %271 = vmatprep.subr.mxu0 0.0
  %272 = vmatpush1.msra.mxu0 0.0
  %273 = vmatprep.subr.mxu0 0.0
  %274 = vmatpush1.msra.mxu0 0.0
  %275 = vmatprep.subr.mxu0 0.0
  %276 = vmatpush1.msra.mxu0 0.0
  %277 = vmatprep.subr.mxu0 0.0
  %278 = vmatpush1.msra.mxu0 0.0
  %279 = vmatprep.subr.mxu0 0.0
  %280 = vmatpush1.msra.mxu0 0.0
  %281 = vmatprep.subr.mxu0 0.0
  %282 = vmatpush1.msra.mxu0 0.0
  %283 = vmatprep.subr.mxu0 0.0
  %284 = vmatpush1.msra.mxu0 0.0
  %285 = vmatprep.subr.mxu0 0.0
  %286 = vmatpush1.msra.mxu0 0.0
  %287 = vmatprep.subr.mxu0 0.0
  %288 = vmatpush1.msra.mxu0 0.0
  %289 = vmatprep.subr.mxu0 0.0
  %290 = vmatpush1.msra.mxu0 0.0
  %291 = vmatprep.subr.mxu0 0.0
  %292 = vmatpush1.msra.mxu0 0.0
  %293 = vmatprep.subr.mxu0 0.0
  %294 = vmatpush1.msra.mxu0 0.0
  %295 = vmatprep.subr.mxu0 0.0
  %296 = vmatpush1.msra.mxu0 0.0
  %297 = vmatprep.subr.mxu0 0.0
  %298 = vmatpush1.msra.mxu0 0.0
  %299 = vmatprep.subr.mxu0 0.0
  %300 = vmatpush1.msra.mxu0 0.0
  %301 = vmatprep.mubr.f32.mxu0 0.0
  %302 = vmatmul.mubr.f32.gmra.mrb[0].mxu0 %v164
  %v303 = vpop.f32.mrb[0].mxu0
  %v304 = vadd.f32 0.0, %v303
  %v305 = vpop.f32.mrb[0].mxu0
  %v306 = vadd.f32 0.0, %v305
  %307 = vdwg.mxu0
  %308 = vmatprep.subr.mxu0 %v23
  %309 = vmatpush1.msra.mxu0 %v22
  %310 = vmatprep.subr.mxu0 %v39
  %311 = vmatpush1.msra.mxu0 %v38
  %312 = vmatprep.subr.mxu0 %v55
  %313 = vmatpush1.msra.mxu0 %v54
  %314 = vmatprep.subr.mxu0 %v71
  %315 = vmatpush1.msra.mxu0 %v70
  %316 = vmatprep.subr.mxu0 %v87
  %317 = vmatpush1.msra.mxu0 %v86
  %318 = vmatprep.subr.mxu0 %v103
  %319 = vmatpush1.msra.mxu0 %v102
  %320 = vmatprep.subr.mxu0 %v119
  %321 = vmatpush1.msra.mxu0 %v118
  %322 = vmatprep.subr.mxu0 %v135
  %323 = vmatpush1.msra.mxu0 %v134
  %324 = vmatprep.subr.mxu0 %v151
  %325 = vmatpush1.msra.mxu0 %v150
  %326 = vmatprep.subr.mxu0 0.0
  %327 = vmatpush1.msra.mxu0 0.0
  %328 = vmatprep.subr.mxu0 0.0
  %329 = vmatpush1.msra.mxu0 0.0
  %330 = vmatprep.subr.mxu0 0.0
  %331 = vmatpush1.msra.mxu0 0.0
  %332 = vmatprep.subr.mxu0 0.0
  %333 = vmatpush1.msra.mxu0 0.0
  %334 = vmatprep.subr.mxu0 0.0
  %335 = vmatpush1.msra.mxu0 0.0
  %336 = vmatprep.subr.mxu0 0.0
  %337 = vmatpush1.msra.mxu0 0.0
  %338 = vmatprep.subr.mxu0 0.0
  %339 = vmatpush1.msra.mxu0 0.0
  %340 = vmatprep.subr.mxu0 0.0
  %341 = vmatpush1.msra.mxu0 0.0
  %342 = vmatprep.subr.mxu0 0.0
  %343 = vmatpush1.msra.mxu0 0.0
  %344 = vmatprep.subr.mxu0 0.0
  %345 = vmatpush1.msra.mxu0 0.0
  %346 = vmatprep.subr.mxu0 0.0
  %347 = vmatpush1.msra.mxu0 0.0
  %348 = vmatprep.subr.mxu0 0.0
  %349 = vmatpush1.msra.mxu0 0.0
  %350 = vmatprep.subr.mxu0 0.0
  %351 = vmatpush1.msra.mxu0 0.0
  %352 = vmatprep.subr.mxu0 0.0
  %353 = vmatpush1.msra.mxu0 0.0
  %354 = vmatprep.subr.mxu0 0.0
  %355 = vmatpush1.msra.mxu0 0.0
  %356 = vmatprep.subr.mxu0 0.0
  %357 = vmatpush1.msra.mxu0 0.0
  %358 = vmatprep.subr.mxu0 0.0
  %359 = vmatpush1.msra.mxu0 0.0
  %360 = vmatprep.subr.mxu0 0.0
  %361 = vmatpush1.msra.mxu0 0.0
  %362 = vmatprep.subr.mxu0 0.0
  %363 = vmatpush1.msra.mxu0 0.0
  %364 = vmatprep.subr.mxu0 0.0
  %365 = vmatpush1.msra.mxu0 0.0
  %366 = vmatprep.subr.mxu0 0.0
  %367 = vmatpush1.msra.mxu0 0.0
  %368 = vmatprep.subr.mxu0 0.0
  %369 = vmatpush1.msra.mxu0 0.0
  %370 = vmatprep.subr.mxu0 0.0
  %371 = vmatpush1.msra.mxu0 0.0
  %372 = vmatprep.mubr.f32.mxu0 0.0
  %373 = vmatmul.mubr.f32.gmra.mrb[0].mxu0 %v164
  %v374 = vpop.f32.mrb[0].mxu0
  %v375 = vadd.f32 0.0, %v374
  %v376 = vpop.f32.mrb[0].mxu0
  %v377 = vadd.f32 0.0, %v376
  %378 = vdwg.mxu0
  %379 = vmatprep.subr.mxu0 %v25
  %380 = vmatpush1.msra.mxu0 %v24
  %381 = vmatprep.subr.mxu0 %v41
  %382 = vmatpush1.msra.mxu0 %v40
  %383 = vmatprep.subr.mxu0 %v57
  %384 = vmatpush1.msra.mxu0 %v56
  %385 = vmatprep.subr.mxu0 %v73
  %386 = vmatpush1.msra.mxu0 %v72
  %387 = vmatprep.subr.mxu0 %v89
  %388 = vmatpush1.msra.mxu0 %v88
  %389 = vmatprep.subr.mxu0 %v105
  %390 = vmatpush1.msra.mxu0 %v104
  %391 = vmatprep.subr.mxu0 %v121
  %392 = vmatpush1.msra.mxu0 %v120
  %393 = vmatprep.subr.mxu0 %v137
  %394 = vmatpush1.msra.mxu0 %v136
  %395 = vmatprep.subr.mxu0 %v153
  %396 = vmatpush1.msra.mxu0 %v152
  %397 = vmatprep.subr.mxu0 0.0
  %398 = vmatpush1.msra.mxu0 0.0
  %399 = vmatprep.subr.mxu0 0.0
  %400 = vmatpush1.msra.mxu0 0.0
  %401 = vmatprep.subr.mxu0 0.0
  %402 = vmatpush1.msra.mxu0 0.0
  %403 = vmatprep.subr.mxu0 0.0
  %404 = vmatpush1.msra.mxu0 0.0
  %405 = vmatprep.subr.mxu0 0.0
  %406 = vmatpush1.msra.mxu0 0.0
  %407 = vmatprep.subr.mxu0 0.0
  %408 = vmatpush1.msra.mxu0 0.0
  %409 = vmatprep.subr.mxu0 0.0
  %410 = vmatpush1.msra.mxu0 0.0
  %411 = vmatprep.subr.mxu0 0.0
  %412 = vmatpush1.msra.mxu0 0.0
  %413 = vmatprep.subr.mxu0 0.0
  %414 = vmatpush1.msra.mxu0 0.0
  %415 = vmatprep.subr.mxu0 0.0
  %416 = vmatpush1.msra.mxu0 0.0
  %417 = vmatprep.subr.mxu0 0.0
  %418 = vmatpush1.msra.mxu0 0.0
  %419 = vmatprep.subr.mxu0 0.0
  %420 = vmatpush1.msra.mxu0 0.0
  %421 = vmatprep.subr.mxu0 0.0
  %422 = vmatpush1.msra.mxu0 0.0
  %423 = vmatprep.subr.mxu0 0.0
  %424 = vmatpush1.msra.mxu0 0.0
  %425 = vmatprep.subr.mxu0 0.0
  %426 = vmatpush1.msra.mxu0 0.0
  %427 = vmatprep.subr.mxu0 0.0
  %428 = vmatpush1.msra.mxu0 0.0
  %429 = vmatprep.subr.mxu0 0.0
  %430 = vmatpush1.msra.mxu0 0.0
  %431 = vmatprep.subr.mxu0 0.0
  %432 = vmatpush1.msra.mxu0 0.0
  %433 = vmatprep.subr.mxu0 0.0
  %434 = vmatpush1.msra.mxu0 0.0
  %435 = vmatprep.subr.mxu0 0.0
  %436 = vmatpush1.msra.mxu0 0.0
  %437 = vmatprep.subr.mxu0 0.0
  %438 = vmatpush1.msra.mxu0 0.0
  %439 = vmatprep.subr.mxu0 0.0
  %440 = vmatpush1.msra.mxu0 0.0
  %441 = vmatprep.subr.mxu0 0.0
  %442 = vmatpush1.msra.mxu0 0.0
  %443 = vmatprep.mubr.f32.mxu0 0.0
  %444 = vmatmul.mubr.f32.gmra.mrb[0].mxu0 %v164
  %v445 = vpop.f32.mrb[0].mxu0
  %v446 = vadd.f32 0.0, %v445
  %v447 = vpop.f32.mrb[0].mxu0
  %v448 = vadd.f32 0.0, %v447
  %449 = vdwg.mxu0
  %450 = vmatprep.subr.mxu0 %v27
  %451 = vmatpush1.msra.mxu0 %v26
  %452 = vmatprep.subr.mxu0 %v43
  %453 = vmatpush1.msra.mxu0 %v42
  %454 = vmatprep.subr.mxu0 %v59
  %455 = vmatpush1.msra.mxu0 %v58
  %456 = vmatprep.subr.mxu0 %v75
  %457 = vmatpush1.msra.mxu0 %v74
  %458 = vmatprep.subr.mxu0 %v91
  %459 = vmatpush1.msra.mxu0 %v90
  %460 = vmatprep.subr.mxu0 %v107
  %461 = vmatpush1.msra.mxu0 %v106
  %462 = vmatprep.subr.mxu0 %v123
  %463 = vmatpush1.msra.mxu0 %v122
  %464 = vmatprep.subr.mxu0 %v139
  %465 = vmatpush1.msra.mxu0 %v138
  %466 = vmatprep.subr.mxu0 %v155
  %467 = vmatpush1.msra.mxu0 %v154
  %468 = vmatprep.subr.mxu0 0.0
  %469 = vmatpush1.msra.mxu0 0.0
  %470 = vmatprep.subr.mxu0 0.0
  %471 = vmatpush1.msra.mxu0 0.0
  %472 = vmatprep.subr.mxu0 0.0
  %473 = vmatpush1.msra.mxu0 0.0
  %474 = vmatprep.subr.mxu0 0.0
  %475 = vmatpush1.msra.mxu0 0.0
  %476 = vmatprep.subr.mxu0 0.0
  %477 = vmatpush1.msra.mxu0 0.0
  %478 = vmatprep.subr.mxu0 0.0
  %479 = vmatpush1.msra.mxu0 0.0
  %480 = vmatprep.subr.mxu0 0.0
  %481 = vmatpush1.msra.mxu0 0.0
  %482 = vmatprep.subr.mxu0 0.0
  %483 = vmatpush1.msra.mxu0 0.0
  %484 = vmatprep.subr.mxu0 0.0
  %485 = vmatpush1.msra.mxu0 0.0
  %486 = vmatprep.subr.mxu0 0.0
  %487 = vmatpush1.msra.mxu0 0.0
  %488 = vmatprep.subr.mxu0 0.0
  %489 = vmatpush1.msra.mxu0 0.0
  %490 = vmatprep.subr.mxu0 0.0
  %491 = vmatpush1.msra.mxu0 0.0
  %492 = vmatprep.subr.mxu0 0.0
  %493 = vmatpush1.msra.mxu0 0.0
  %494 = vmatprep.subr.mxu0 0.0
  %495 = vmatpush1.msra.mxu0 0.0
  %496 = vmatprep.subr.mxu0 0.0
  %497 = vmatpush1.msra.mxu0 0.0
  %498 = vmatprep.subr.mxu0 0.0
  %499 = vmatpush1.msra.mxu0 0.0
  %500 = vmatprep.subr.mxu0 0.0
  %501 = vmatpush1.msra.mxu0 0.0
  %502 = vmatprep.subr.mxu0 0.0
  %503 = vmatpush1.msra.mxu0 0.0
  %504 = vmatprep.subr.mxu0 0.0
  %505 = vmatpush1.msra.mxu0 0.0
  %506 = vmatprep.subr.mxu0 0.0
  %507 = vmatpush1.msra.mxu0 0.0
  %508 = vmatprep.subr.mxu0 0.0
  %509 = vmatpush1.msra.mxu0 0.0
  %510 = vmatprep.subr.mxu0 0.0
  %511 = vmatpush1.msra.mxu0 0.0
  %512 = vmatprep.subr.mxu0 0.0
  %513 = vmatpush1.msra.mxu0 0.0
  %514 = vmatprep.mubr.f32.mxu0 0.0
  %515 = vmatmul.mubr.f32.gmra.mrb[0].mxu0 %v164
  %v516 = vpop.f32.mrb[0].mxu0
  %v517 = vadd.f32 0.0, %v516
  %v518 = vpop.f32.mrb[0].mxu0
  %v519 = vadd.f32 0.0, %v518
  %520 = vdwg.mxu0
  %521 = vmatprep.subr.mxu0 %v29
  %522 = vmatpush1.msra.mxu0 %v28
  %523 = vmatprep.subr.mxu0 %v45
  %524 = vmatpush1.msra.mxu0 %v44
  %525 = vmatprep.subr.mxu0 %v61
  %526 = vmatpush1.msra.mxu0 %v60
  %527 = vmatprep.subr.mxu0 %v77
  %528 = vmatpush1.msra.mxu0 %v76
  %529 = vmatprep.subr.mxu0 %v93
  %530 = vmatpush1.msra.mxu0 %v92
  %531 = vmatprep.subr.mxu0 %v109
  %532 = vmatpush1.msra.mxu0 %v108
  %533 = vmatprep.subr.mxu0 %v125
  %534 = vmatpush1.msra.mxu0 %v124
  %535 = vmatprep.subr.mxu0 %v141
  %536 = vmatpush1.msra.mxu0 %v140
  %537 = vmatprep.subr.mxu0 %v157
  %538 = vmatpush1.msra.mxu0 %v156
  %539 = vmatprep.subr.mxu0 0.0
  %540 = vmatpush1.msra.mxu0 0.0
  %541 = vmatprep.subr.mxu0 0.0
  %542 = vmatpush1.msra.mxu0 0.0
  %543 = vmatprep.subr.mxu0 0.0
  %544 = vmatpush1.msra.mxu0 0.0
  %545 = vmatprep.subr.mxu0 0.0
  %546 = vmatpush1.msra.mxu0 0.0
  %547 = vmatprep.subr.mxu0 0.0
  %548 = vmatpush1.msra.mxu0 0.0
  %549 = vmatprep.subr.mxu0 0.0
  %550 = vmatpush1.msra.mxu0 0.0
  %551 = vmatprep.subr.mxu0 0.0
  %552 = vmatpush1.msra.mxu0 0.0
  %553 = vmatprep.subr.mxu0 0.0
  %554 = vmatpush1.msra.mxu0 0.0
  %555 = vmatprep.subr.mxu0 0.0
  %556 = vmatpush1.msra.mxu0 0.0
  %557 = vmatprep.subr.mxu0 0.0
  %558 = vmatpush1.msra.mxu0 0.0
  %559 = vmatprep.subr.mxu0 0.0
  %560 = vmatpush1.msra.mxu0 0.0
  %561 = vmatprep.subr.mxu0 0.0
  %562 = vmatpush1.msra.mxu0 0.0
  %563 = vmatprep.subr.mxu0 0.0
  %564 = vmatpush1.msra.mxu0 0.0
  %565 = vmatprep.subr.mxu0 0.0
  %566 = vmatpush1.msra.mxu0 0.0
  %567 = vmatprep.subr.mxu0 0.0
  %568 = vmatpush1.msra.mxu0 0.0
  %569 = vmatprep.subr.mxu0 0.0
  %570 = vmatpush1.msra.mxu0 0.0
  %571 = vmatprep.subr.mxu0 0.0
  %572 = vmatpush1.msra.mxu0 0.0
  %573 = vmatprep.subr.mxu0 0.0
  %574 = vmatpush1.msra.mxu0 0.0
  %575 = vmatprep.subr.mxu0 0.0
  %576 = vmatpush1.msra.mxu0 0.0
  %577 = vmatprep.subr.mxu0 0.0
  %578 = vmatpush1.msra.mxu0 0.0
  %579 = vmatprep.subr.mxu0 0.0
  %580 = vmatpush1.msra.mxu0 0.0
  %581 = vmatprep.subr.mxu0 0.0
  %582 = vmatpush1.msra.mxu0 0.0
  %583 = vmatprep.subr.mxu0 0.0
  %584 = vmatpush1.msra.mxu0 0.0
  %585 = vmatprep.mubr.f32.mxu0 0.0
  %586 = vmatmul.mubr.f32.gmra.mrb[0].mxu0 %v164
  %v587 = vpop.f32.mrb[0].mxu0
  %v588 = vadd.f32 0.0, %v587
  %v589 = vpop.f32.mrb[0].mxu0
  %v590 = vadd.f32 0.0, %v589
  %591 = vdwg.mxu0
  %592 = vmatprep.subr.mxu0 %v31
  %593 = vmatpush1.msra.mxu0 %v30
  %594 = vmatprep.subr.mxu0 %v47
  %595 = vmatpush1.msra.mxu0 %v46
  %596 = vmatprep.subr.mxu0 %v63
  %597 = vmatpush1.msra.mxu0 %v62
  %598 = vmatprep.subr.mxu0 %v79
  %599 = vmatpush1.msra.mxu0 %v78
  %600 = vmatprep.subr.mxu0 %v95
  %601 = vmatpush1.msra.mxu0 %v94
  %602 = vmatprep.subr.mxu0 %v111
  %603 = vmatpush1.msra.mxu0 %v110
  %604 = vmatprep.subr.mxu0 %v127
  %605 = vmatpush1.msra.mxu0 %v126
  %606 = vmatprep.subr.mxu0 %v143
  %607 = vmatpush1.msra.mxu0 %v142
  %608 = vmatprep.subr.mxu0 %v159
  %609 = vmatpush1.msra.mxu0 %v158
  %610 = vmatprep.subr.mxu0 0.0
  %611 = vmatpush1.msra.mxu0 0.0
  %612 = vmatprep.subr.mxu0 0.0
  %613 = vmatpush1.msra.mxu0 0.0
  %614 = vmatprep.subr.mxu0 0.0
  %615 = vmatpush1.msra.mxu0 0.0
  %616 = vmatprep.subr.mxu0 0.0
  %617 = vmatpush1.msra.mxu0 0.0
  %618 = vmatprep.subr.mxu0 0.0
  %619 = vmatpush1.msra.mxu0 0.0
  %620 = vmatprep.subr.mxu0 0.0
  %621 = vmatpush1.msra.mxu0 0.0
  %622 = vmatprep.subr.mxu0 0.0
  %623 = vmatpush1.msra.mxu0 0.0
  %624 = vmatprep.subr.mxu0 0.0
  %625 = vmatpush1.msra.mxu0 0.0
  %626 = vmatprep.subr.mxu0 0.0
  %627 = vmatpush1.msra.mxu0 0.0
  %628 = vmatprep.subr.mxu0 0.0
  %629 = vmatpush1.msra.mxu0 0.0
  %630 = vmatprep.subr.mxu0 0.0
  %631 = vmatpush1.msra.mxu0 0.0
  %632 = vmatprep.subr.mxu0 0.0
  %633 = vmatpush1.msra.mxu0 0.0
  %634 = vmatprep.subr.mxu0 0.0
  %635 = vmatpush1.msra.mxu0 0.0
  %636 = vmatprep.subr.mxu0 0.0
  %637 = vmatpush1.msra.mxu0 0.0
  %638 = vmatprep.subr.mxu0 0.0
  %639 = vmatpush1.msra.mxu0 0.0
  %640 = vmatprep.subr.mxu0 0.0
  %641 = vmatpush1.msra.mxu0 0.0
  %642 = vmatprep.subr.mxu0 0.0
  %643 = vmatpush1.msra.mxu0 0.0
  %644 = vmatprep.subr.mxu0 0.0
  %645 = vmatpush1.msra.mxu0 0.0
  %646 = vmatprep.subr.mxu0 0.0
  %647 = vmatpush1.msra.mxu0 0.0
  %648 = vmatprep.subr.mxu0 0.0
  %649 = vmatpush1.msra.mxu0 0.0
  %650 = vmatprep.subr.mxu0 0.0
  %651 = vmatpush1.msra.mxu0 0.0
  %652 = vmatprep.subr.mxu0 0.0
  %653 = vmatpush1.msra.mxu0 0.0
  %654 = vmatprep.subr.mxu0 0.0
  %655 = vmatpush1.msra.mxu0 0.0
  %656 = vmatprep.mubr.f32.mxu0 0.0
  %657 = vmatmul.mubr.f32.gmra.mrb[0].mxu0 %v164
  %v658 = vpop.f32.mrb[0].mxu0
  %v659 = vadd.f32 0.0, %v658
  %v660 = vpop.f32.mrb[0].mxu0
  %v661 = vadd.f32 0.0, %v660
  %662 = vdwg.mxu0
  %663 = vmatprep.subr.mxu0 %v33
  %664 = vmatpush1.msra.mxu0 %v32
  %665 = vmatprep.subr.mxu0 %v49
  %666 = vmatpush1.msra.mxu0 %v48
  %667 = vmatprep.subr.mxu0 %v65
  %668 = vmatpush1.msra.mxu0 %v64
  %669 = vmatprep.subr.mxu0 %v81
  %670 = vmatpush1.msra.mxu0 %v80
  %671 = vmatprep.subr.mxu0 %v97
  %672 = vmatpush1.msra.mxu0 %v96
  %673 = vmatprep.subr.mxu0 %v113
  %674 = vmatpush1.msra.mxu0 %v112
  %675 = vmatprep.subr.mxu0 %v129
  %676 = vmatpush1.msra.mxu0 %v128
  %677 = vmatprep.subr.mxu0 %v145
  %678 = vmatpush1.msra.mxu0 %v144
  %679 = vmatprep.subr.mxu0 %v161
  %680 = vmatpush1.msra.mxu0 %v160
  %681 = vmatprep.subr.mxu0 0.0
  %682 = vmatpush1.msra.mxu0 0.0
  %683 = vmatprep.subr.mxu0 0.0
  %684 = vmatpush1.msra.mxu0 0.0
  %685 = vmatprep.subr.mxu0 0.0
  %686 = vmatpush1.msra.mxu0 0.0
  %687 = vmatprep.subr.mxu0 0.0
  %688 = vmatpush1.msra.mxu0 0.0
  %689 = vmatprep.subr.mxu0 0.0
  %690 = vmatpush1.msra.mxu0 0.0
  %691 = vmatprep.subr.mxu0 0.0
  %692 = vmatpush1.msra.mxu0 0.0
  %693 = vmatprep.subr.mxu0 0.0
  %694 = vmatpush1.msra.mxu0 0.0
  %695 = vmatprep.subr.mxu0 0.0
  %696 = vmatpush1.msra.mxu0 0.0
  %697 = vmatprep.subr.mxu0 0.0
  %698 = vmatpush1.msra.mxu0 0.0
  %699 = vmatprep.subr.mxu0 0.0
  %700 = vmatpush1.msra.mxu0 0.0
  %701 = vmatprep.subr.mxu0 0.0
  %702 = vmatpush1.msra.mxu0 0.0
  %703 = vmatprep.subr.mxu0 0.0
  %704 = vmatpush1.msra.mxu0 0.0
  %705 = vmatprep.subr.mxu0 0.0
  %706 = vmatpush1.msra.mxu0 0.0
  %707 = vmatprep.subr.mxu0 0.0
  %708 = vmatpush1.msra.mxu0 0.0
  %709 = vmatprep.subr.mxu0 0.0
  %710 = vmatpush1.msra.mxu0 0.0
  %711 = vmatprep.subr.mxu0 0.0
  %712 = vmatpush1.msra.mxu0 0.0
  %713 = vmatprep.subr.mxu0 0.0
  %714 = vmatpush1.msra.mxu0 0.0
  %715 = vmatprep.subr.mxu0 0.0
  %716 = vmatpush1.msra.mxu0 0.0
  %717 = vmatprep.subr.mxu0 0.0
  %718 = vmatpush1.msra.mxu0 0.0
  %719 = vmatprep.subr.mxu0 0.0
  %720 = vmatpush1.msra.mxu0 0.0
  %721 = vmatprep.subr.mxu0 0.0
  %722 = vmatpush1.msra.mxu0 0.0
  %723 = vmatprep.subr.mxu0 0.0
  %724 = vmatpush1.msra.mxu0 0.0
  %725 = vmatprep.subr.mxu0 0.0
  %726 = vmatpush1.msra.mxu0 0.0
  %727 = vmatprep.mubr.f32.mxu0 0.0
  %728 = vmatmul.mubr.f32.gmra.mrb[0].mxu0 %v164
  %v729 = vpop.f32.mrb[0].mxu0
  %v730 = vadd.f32 0.0, %v729
  %v731 = vpop.f32.mrb[0].mxu0
  %v732 = vadd.f32 0.0, %v731
  %733 = vdwg.mxu0
  %vm734 = vcmask 1043456
  %v735 = vsel %vm734, %v233, 0.0
  %v736 = vsel %vm734, %v235, 0.0
  %v737 = vadd.f32 %v735, %v736
  %v738 = vsel %vm734, %v304, 0.0
  %v739 = vadd.f32 %v737, %v738
  %v740 = vsel %vm734, %v306, 0.0
  %v741 = vadd.f32 %v739, %v740
  %v742 = vsel %vm734, %v375, 0.0
  %v743 = vadd.f32 %v741, %v742
  %v744 = vsel %vm734, %v377, 0.0
  %v745 = vadd.f32 %v743, %v744
  %v746 = vsel %vm734, %v446, 0.0
  %v747 = vadd.f32 %v745, %v746
  %v748 = vsel %vm734, %v448, 0.0
  %v749 = vadd.f32 %v747, %v748
  %v750 = vsel %vm734, %v517, 0.0
  %v751 = vadd.f32 %v749, %v750
  %v752 = vsel %vm734, %v519, 0.0
  %v753 = vadd.f32 %v751, %v752
  %v754 = vsel %vm734, %v588, 0.0
  %v755 = vadd.f32 %v753, %v754
  %v756 = vsel %vm734, %v590, 0.0
  %v757 = vadd.f32 %v755, %v756
  %v758 = vsel %vm734, %v659, 0.0
  %v759 = vadd.f32 %v757, %v758
  %v760 = vsel %vm734, %v661, 0.0
  %v761 = vadd.f32 %v759, %v760
  %v762 = vsel %vm734, %v730, 0.0
  %v763 = vadd.f32 %v761, %v762
  %v764 = vsel %vm734, %v732, 0.0
  %v765 = vadd.f32 %v763, %v764
  %766 = vadd.xlane.f32.xlu0 %v765
  %v767 = vpop.xlane.xlu0 %766
  %v768 = vmul.f32 %v767, 0.00048828125
  %v769 = vsub.f32 %v233, %v768
  %v770 = vsub.f32 %v235, %v768
  %v771 = vsub.f32 %v304, %v768
  %v772 = vsub.f32 %v306, %v768
  %v773 = vsub.f32 %v375, %v768
  %v774 = vsub.f32 %v377, %v768
  %v775 = vsub.f32 %v446, %v768
  %v776 = vsub.f32 %v448, %v768
  %v777 = vsub.f32 %v517, %v768
  %v778 = vsub.f32 %v519, %v768
  %v779 = vsub.f32 %v588, %v768
  %v780 = vsub.f32 %v590, %v768
  %v781 = vsub.f32 %v659, %v768
  %v782 = vsub.f32 %v661, %v768
  %v783 = vsub.f32 %v730, %v768
  %v784 = vsub.f32 %v732, %v768
  %v785 = vmul.f32 %v769, %v769
  %v786 = vmul.f32 %v770, %v770
  %v787 = vmul.f32 %v771, %v771
  %v788 = vmul.f32 %v772, %v772
  %v789 = vmul.f32 %v773, %v773
  %v790 = vmul.f32 %v774, %v774
  %v791 = vmul.f32 %v775, %v775
  %v792 = vmul.f32 %v776, %v776
  %v793 = vmul.f32 %v777, %v777
  %v794 = vmul.f32 %v778, %v778
  %v795 = vmul.f32 %v779, %v779
  %v796 = vmul.f32 %v780, %v780
  %v797 = vmul.f32 %v781, %v781
  %v798 = vmul.f32 %v782, %v782
  %v799 = vmul.f32 %v783, %v783
  %v800 = vmul.f32 %v784, %v784
  %v801 = vsel %vm734, %v785, 0.0
  %v802 = vsel %vm734, %v786, 0.0
  %v803 = vadd.f32 %v801, %v802
  %v804 = vsel %vm734, %v787, 0.0
  %v805 = vadd.f32 %v803, %v804
  %v806 = vsel %vm734, %v788, 0.0
  %v807 = vadd.f32 %v805, %v806
  %v808 = vsel %vm734, %v789, 0.0
  %v809 = vadd.f32 %v807, %v808
  %v810 = vsel %vm734, %v790, 0.0
  %v811 = vadd.f32 %v809, %v810
  %v812 = vsel %vm734, %v791, 0.0
  %v813 = vadd.f32 %v811, %v812
  %v814 = vsel %vm734, %v792, 0.0
  %v815 = vadd.f32 %v813, %v814
  %v816 = vsel %vm734, %v793, 0.0
  %v817 = vadd.f32 %v815, %v816
  %v818 = vsel %vm734, %v794, 0.0
  %v819 = vadd.f32 %v817, %v818
  %v820 = vsel %vm734, %v795, 0.0
  %v821 = vadd.f32 %v819, %v820
  %v822 = vsel %vm734, %v796, 0.0
  %v823 = vadd.f32 %v821, %v822
  %v824 = vsel %vm734, %v797, 0.0
  %v825 = vadd.f32 %v823, %v824
  %v826 = vsel %vm734, %v798, 0.0
  %v827 = vadd.f32 %v825, %v826
  %v828 = vsel %vm734, %v799, 0.0
  %v829 = vadd.f32 %v827, %v828
  %v830 = vsel %vm734, %v800, 0.0
  %v831 = vadd.f32 %v829, %v830
  %832 = vadd.xlane.f32.xlu0 %v831
  %v833 = vpop.xlane.xlu0 %832
  %v834 = vmul.f32 %v833, 0.00048828125
  %v835 = vadd.f32 %v834, 1e-05
  %v836 = vrsqrt.pop %v835
  %v837 = vld [vmem:[%s2] sm:$0xf]
  %v838 = vmul.f32 %v836, %v837
  %840 = vset.pattern.permute.xlu0 0
  %841 = vperm.xlu0 %840, %v838
  %v842 = vpop.permute.xlu0 %841
  %v844 = vmul.f32 %v769, %v842
  %v845 = vmul.f32 %v770, %v842
  %v846 = vmul.f32 %v771, %v842
  %v847 = vmul.f32 %v772, %v842
  %v848 = vmul.f32 %v773, %v842
  %v849 = vmul.f32 %v774, %v842
  %v850 = vmul.f32 %v775, %v842
  %v851 = vmul.f32 %v776, %v842
  %v852 = vmul.f32 %v777, %v842
  %v853 = vmul.f32 %v778, %v842
  %v854 = vmul.f32 %v779, %v842
  %v855 = vmul.f32 %v780, %v842
  %v856 = vmul.f32 %v781, %v842
  %v857 = vmul.f32 %v782, %v842
  %v858 = vmul.f32 %v783, %v842
  %v859 = vmul.f32 %v784, %v842
  %v860 = vld [vmem:[%s3] sm:$0xf]
  %862 = vset.pattern.permute.xlu0 0
  %863 = vperm.xlu0 %862, %v860
  %v864 = vpop.permute.xlu0 %863
  %v866 = vadd.f32 %v844, %v864
  %v867 = vadd.f32 %v845, %v864
  %v868 = vadd.f32 %v846, %v864
  %v869 = vadd.f32 %v847, %v864
  %v870 = vadd.f32 %v848, %v864
  %v871 = vadd.f32 %v849, %v864
  %v872 = vadd.f32 %v850, %v864
  %v873 = vadd.f32 %v851, %v864
  %v874 = vadd.f32 %v852, %v864
  %v875 = vadd.f32 %v853, %v864
  %v876 = vadd.f32 %v854, %v864
  %v877 = vadd.f32 %v855, %v864
  %v878 = vadd.f32 %v856, %v864
  %v879 = vadd.f32 %v857, %v864
  %v880 = vadd.f32 %v858, %v864
  %v881 = vadd.f32 %v859, %v864
  %v882 = vmax.f32 %v866, 0.0
  %v883 = vmax.f32 %v867, 0.0
  %v884 = vmax.f32 %v868, 0.0
  %v885 = vmax.f32 %v869, 0.0
  %v886 = vmax.f32 %v870, 0.0
  %v887 = vmax.f32 %v871, 0.0
  %v888 = vmax.f32 %v872, 0.0
  %v889 = vmax.f32 %v873, 0.0
  %v890 = vmax.f32 %v874, 0.0
  %v891 = vmax.f32 %v875, 0.0
  %v892 = vmax.f32 %v876, 0.0
  %v893 = vmax.f32 %v877, 0.0
  %v894 = vmax.f32 %v878, 0.0
  %v895 = vmax.f32 %v879, 0.0
  %v896 = vmax.f32 %v880, 0.0
  %v897 = vmax.f32 %v881, 0.0
  %v914 = vcombine.low %v882, %v883
  %v915 = vcombine.low %v884, %v885
  %v916 = vcombine.low %v886, %v887
  %v917 = vcombine.low %v888, %v889
  %v918 = vcombine.low %v890, %v891
  %v919 = vcombine.low %v892, %v893
  %v920 = vcombine.low %v894, %v895
  %v921 = vcombine.low %v896, %v897
  %930 = vst [vmem:[%s4] sm:$0xff] %v914
  %931 = vst [vmem:[%s4 + $0x8] sm:$0xff] %v915
  %932 = vst [vmem:[%s4 + $0x10] sm:$0xff] %v916
  %933 = vst [vmem:[%s4 + $0x18] sm:$0xff] %v917
  %934 = vst [vmem:[%s4 + $0x20] sm:$0xff] %v918
  %935 = vst [vmem:[%s4 + $0x28] sm:$0xff] %v919
  %936 = vst [vmem:[%s4 + $0x30] sm:$0xff] %v920
  %937 = vst [vmem:[%s4 + $0x38] sm:$0xff] %v921
  // Predicated region
  $region18: #{deconv2d_fuse_forward.3} parent=0 // pred_check
    _
  $region19: #{deconv2d_fuse_forward.3} parent=0 // pred_check_branch
    %939 = sbr.rel (0) target = $region21
  $region20: #{deconv2d_fuse_forward.3} parent=0 // pred_region
    _
  $region21: #{deconv2d_fuse_forward.3} parent=0 // pred_fallthru
    _
  // Predicated region
  $region22: #{deconv2d_fuse_forward.3} parent=0 // pred_check
    _
  $region23: #{deconv2d_fuse_forward.3} parent=0 // pred_check_branch
    %941 = sbr.rel (0) target = $region25
  $region24: #{deconv2d_fuse_forward.3} parent=0 // pred_region
    _
  $region25: #{deconv2d_fuse_forward.3} parent=0 // pred_fallthru
    _

</llo_original>
